<compile_context>
chip_gen: v5e
topology: v5e:2x2
jax: 0.10.0
libtpu: 0.0.40
codegen_flags: <defaults>
</compile_context>

<pallas_src>
import math

import jax
import jax.numpy as jnp
from jax.experimental import pallas as pl
from jax.experimental.pallas import tpu as pltpu


def _layer_norm(x, w, b, eps):
    mu = jnp.mean(x, axis=-1, keepdims=True)
    xc = x - mu
    var = jnp.mean(xc * xc, axis=-1, keepdims=True)
    return xc * jax.lax.rsqrt(var + eps) * w + b


def _gelu_tanh(x):
    # TODO(synk): torch F.gelu defaults to the exact erf form; the tanh
    # approximation is used here for guaranteed Mosaic lowering (~1e-3 max
    # absolute deviation).
    c = math.sqrt(2.0 / math.pi)
    return 0.5 * x * (1.0 + jnp.tanh(c * (x + 0.044715 * (x * x * x))))


def _block_kernel(x_ref, wqkv_ref, bqkv_ref, wp_ref, w1_ref, b1_ref, w2_ref,
                  vec_e_ref, qk_aff_ref, mavg_ref,
                  out_ref, attnw_ref):
    # x_ref:      (B*N, E)     flattened tokens
    # wqkv_ref:   (E, 3E)      [Wq | Wk | Wv], stored (in, out)
    # bqkv_ref:   (1, 3E)      [bq | bk | bv]
    # wp_ref:     (E, E)       attention output projection, (in, out)
    # w1_ref:     (E, M)       mlp fc1 weight      b1_ref: (1, M)
    # w2_ref:     (M, E)       mlp fc2 weight
    # vec_e_ref:  (6, E)       ln1_w, ln1_b, ln2_w, ln2_b, bp, b2
    # qk_aff_ref: (2, 2E)      row0 = [tile(qn_w)*scale | tile(kn_w)]
    #                          row1 = [tile(qn_b)*scale | tile(kn_b)]
    # mavg_ref:   (2E, 2E)     block-diagonal per-head averaging matrix (1/d)
    # out_ref:    (B*N, E)
    # attnw_ref:  (B*H, N, N)  softmax attention weights (pre attn-dropout)
    BN, E = out_ref.shape
    N = attnw_ref.shape[-1]
    B = BN // N
    H = attnw_ref.shape[0] // B
    d = E // H

    x = x_ref[...]                                   # (BN, E)
    vec_e = vec_e_ref[...]
    ln1_w, ln1_b = vec_e[0:1], vec_e[1:2]
    ln2_w, ln2_b = vec_e[2:3], vec_e[3:4]
    bp, b2 = vec_e[4:5], vec_e[5:6]
    wp = wp_ref[...]

    # --- attention_norm + fused QKV projection (single wide matmul) ---
    xn = _layer_norm(x, ln1_w, ln1_b, 1e-6)
    qkv = jnp.dot(xn, wqkv_ref[...],
                  preferred_element_type=jnp.float32) + bqkv_ref[...]   # (BN, 3E)

    # --- per-head LayerNorm on q||k for ALL tokens/heads at once:
    #     segment mean / variance via block-diagonal averaging matmuls,
    #     attention scale + LN affine folded into qk_aff rows. ---
    qk = qkv[:, :2 * E]                              # (BN, 2E)
    mavg = mavg_ref[...]
    mu = jnp.dot(qk, mavg, preferred_element_type=jnp.float32)
    xc = qk - mu
    var = jnp.dot(xc * xc, mavg, preferred_element_type=jnp.float32)
    qk_n = xc * jax.lax.rsqrt(var + 1e-5) * qk_aff_ref[0:1] + qk_aff_ref[1:2]
    v_all = qkv[:, 2 * E:]                           # (BN, E)

    # --- multi-head attention; static loop over (batch, head), B*H tiny ---
    x1_rows = []
    for b in range(B):
        rows = slice(b * N, (b + 1) * N)
        acc = jnp.zeros((N, E), dtype=jnp.float32)
        for h in range(H):
            qh = qk_n[rows, h * d:(h + 1) * d]               # scaled + normed
            kh = qk_n[rows, E + h * d:E + (h + 1) * d]
            vh = v_all[rows, h * d:(h + 1) * d]
            # scores = qh @ kh^T without an explicit transpose
            s = jax.lax.dot_general(qh, kh, (((1,), (1,)), ((), ())),
                                    preferred_element_type=jnp.float32)
            s = s - jnp.max(s, axis=-1, keepdims=True)
            p = jnp.exp(s)
            p = p / jnp.sum(p, axis=-1, keepdims=True)
            attnw_ref[b * H + h] = p                 # returned weights
            # attn dropout is identity in eval mode
            ctx = jnp.dot(p, vh, preferred_element_type=jnp.float32)
            # fold the "concat heads" into the output projection:
            #   proj(concat_h ctx_h) = sum_h ctx_h @ Wp[h*d:(h+1)*d, :]
            acc = acc + jnp.dot(ctx, wp[h * d:(h + 1) * d, :],
                                preferred_element_type=jnp.float32)
        x1_rows.append(x[rows, :] + acc + bp)        # out-proj bias + residual
    x1 = jnp.concatenate(x1_rows, axis=0)            # (BN, E)

    # --- ffn_norm + MLP + residual (dropouts are identity in eval mode) ---
    xn2 = _layer_norm(x1, ln2_w, ln2_b, 1e-6)
    h1 = _gelu_tanh(jnp.dot(xn2, w1_ref[...],
                            preferred_element_type=jnp.float32) + b1_ref[...])
    y = x1 + jnp.dot(h1, w2_ref[...],
                     preferred_element_type=jnp.float32) + b2
    out_ref[...] = y.astype(out_ref.dtype)


def block_forward(x, params, num_heads):
    """Block.forward.  x: [B, N, E]; linear weights given as (in, out)
    (i.e. the transpose of torch's nn.Linear.weight).  Returns (out, weights)
    with out [B, N, E] and weights [B, H, N, N]."""
    B, N, E = x.shape
    H = num_heads
    d = E // H
    M = params["w1"].shape[1]
    scale = float(d) ** -0.5

    # Pack the many tiny parameter vectors into a few dense slabs (fewer DMAs).
    wqkv = jnp.concatenate([params["wq"], params["wk"], params["wv"]], axis=1)  # (E,3E)
    bqkv = jnp.concatenate([params["bq"], params["bk"],
                            params["bv"]]).reshape(1, 3 * E)                    # (1,3E)
    vec_e = jnp.stack([params["ln1_w"], params["ln1_b"],
                       params["ln2_w"], params["ln2_b"],
                       params["bp"], params["b2"]])                             # (6,E)
    # per-head LN affine tiled over heads; attention scale folded into q side
    qk_aff = jnp.stack([
        jnp.concatenate([jnp.tile(params["qn_w"], H) * scale,
                         jnp.tile(params["kn_w"], H)]),
        jnp.concatenate([jnp.tile(params["qn_b"], H) * scale,
                         jnp.tile(params["kn_b"], H)]),
    ])                                                                          # (2,2E)
    # block-diagonal averaging matrix for segment (per-head) mean/variance
    mavg = jnp.kron(jnp.eye(2 * H, dtype=jnp.float32),
                    jnp.full((d, d), 1.0 / d, dtype=jnp.float32))               # (2E,2E)
    b1 = params["b1"].reshape(1, M)

    x2d = x.reshape(B * N, E)       # free reshape; kernel never reshapes

    vmem = pl.BlockSpec(memory_space=pltpu.MemorySpace.VMEM)
    # Single invocation, no grid: the whole working set (<1 MiB) lives in VMEM.
    # TODO(synk): at real ViT scales, tile B*N with a "parallel" grid axis
    # (and cap vmem_limit_bytes) for v7x's 64 MiB VMEM.
    out2d, attn_w = pl.pallas_call(
        _block_kernel,
        out_shape=(
            jax.ShapeDtypeStruct((B * N, E), jnp.float32),
            jax.ShapeDtypeStruct((B * H, N, N), jnp.float32),
        ),
        in_specs=[vmem] * 10,
        out_specs=(vmem, vmem),
    )(x2d, wqkv, bqkv, params["wp"], params["w1"], b1, params["w2"],
      vec_e, qk_aff, mavg)

    return out2d.reshape(B, N, E), attn_w.reshape(B, H, N, N)


if __name__ == "__main__":
    B, N = 2, 8            # batch, sequence length
    E, H, M = 32, 4, 64    # embd_size, num_heads, mlp_dim
    d = E // H

    key = jax.random.PRNGKey(0)
    ks = jax.random.split(key, 18)

    def rnd(k, shape, s=0.05):
        return s * jax.random.normal(k, shape, dtype=jnp.float32)

    x = jax.random.normal(ks[0], (B, N, E), dtype=jnp.float32)

    params = dict(
        # attention_norm / ffn_norm (eps=1e-6)
        ln1_w=jnp.ones((E,), jnp.float32) + rnd(ks[1], (E,)),
        ln1_b=rnd(ks[2], (E,)),
        ln2_w=jnp.ones((E,), jnp.float32) + rnd(ks[3], (E,)),
        ln2_b=rnd(ks[4], (E,)),
        # qkv Linear (bias present: module passes bias=(False,), truthy tuple)
        wq=rnd(ks[5], (E, E)), wk=rnd(ks[6], (E, E)), wv=rnd(ks[7], (E, E)),
        bq=rnd(ks[8], (E,)), bk=rnd(ks[9], (E,)), bv=rnd(ks[10], (E,)),
        # per-head q/k LayerNorms (qk_norm=(False,) truthy -> LayerNorm(head_dim))
        qn_w=jnp.ones((d,), jnp.float32), qn_b=jnp.zeros((d,), jnp.float32),
        kn_w=jnp.ones((d,), jnp.float32), kn_b=jnp.zeros((d,), jnp.float32),
        # attention output projection
        wp=rnd(ks[11], (E, E)), bp=rnd(ks[12], (E,)),
        # MLP
        w1=rnd(ks[13], (E, M)), b1=rnd(ks[14], (M,)),
        w2=rnd(ks[15], (M, E)), b2=rnd(ks[16], (E,)),
    )

    fwd = jax.jit(block_forward, static_argnums=2)
    out, attn_w = fwd(x, params, H)
    out = jax.block_until_ready(out)
    attn_w = jax.block_until_ready(attn_w)

    assert out.shape == (B, N, E) and out.dtype == jnp.float32, out.shape
    assert attn_w.shape == (B, H, N, N) and attn_w.dtype == jnp.float32
    assert bool(jnp.isfinite(out).all()) and bool(jnp.isfinite(attn_w).all())
    # softmax rows must sum to 1
    assert bool(jnp.allclose(attn_w.sum(-1), 1.0, atol=1e-5))
    print("KERNEL_OK")
</pallas_src>

<mosaic_0001>
module attributes {stable_mosaic.version = 11 : i64} {
  func.func @_block_kernel(%arg0: memref<16x32xf32, #tpu.memory_space<vmem>>, %arg1: memref<32x96xf32, #tpu.memory_space<vmem>>, %arg2: memref<1x96xf32, #tpu.memory_space<vmem>>, %arg3: memref<32x32xf32, #tpu.memory_space<vmem>>, %arg4: memref<32x64xf32, #tpu.memory_space<vmem>>, %arg5: memref<1x64xf32, #tpu.memory_space<vmem>>, %arg6: memref<64x32xf32, #tpu.memory_space<vmem>>, %arg7: memref<6x32xf32, #tpu.memory_space<vmem>>, %arg8: memref<2x64xf32, #tpu.memory_space<vmem>>, %arg9: memref<64x64xf32, #tpu.memory_space<vmem>>, %arg10: memref<16x32xf32, #tpu.memory_space<vmem>>, %arg11: memref<8x8x8xf32, #tpu.memory_space<vmem>>) attributes {dimension_semantics = [], scalar_prefetch = 0 : i64, scratch_operands = 0 : i64, tpu.core_type = #tpu.core_type<tc>} {
    %c0 = arith.constant 0 : index
    %c0_0 = arith.constant 0 : index
    %0 = vector.load %arg0[%c0, %c0_0] : memref<16x32xf32, #tpu.memory_space<vmem>>, vector<16x32xf32>
    %c0_1 = arith.constant 0 : index
    %c0_2 = arith.constant 0 : index
    %1 = vector.load %arg7[%c0_1, %c0_2] : memref<6x32xf32, #tpu.memory_space<vmem>>, vector<6x32xf32>
    %2 = vector.extract_strided_slice %1 {offsets = [0, 0], sizes = [1, 32], strides = [1, 1]} : vector<6x32xf32> to vector<1x32xf32>
    %3 = vector.extract_strided_slice %1 {offsets = [1, 0], sizes = [1, 32], strides = [1, 1]} : vector<6x32xf32> to vector<1x32xf32>
    %4 = vector.extract_strided_slice %1 {offsets = [2, 0], sizes = [1, 32], strides = [1, 1]} : vector<6x32xf32> to vector<1x32xf32>
    %5 = vector.extract_strided_slice %1 {offsets = [3, 0], sizes = [1, 32], strides = [1, 1]} : vector<6x32xf32> to vector<1x32xf32>
    %6 = vector.extract_strided_slice %1 {offsets = [4, 0], sizes = [1, 32], strides = [1, 1]} : vector<6x32xf32> to vector<1x32xf32>
    %7 = vector.extract_strided_slice %1 {offsets = [5, 0], sizes = [1, 32], strides = [1, 1]} : vector<6x32xf32> to vector<1x32xf32>
    %c0_3 = arith.constant 0 : index
    %c0_4 = arith.constant 0 : index
    %8 = vector.load %arg3[%c0_3, %c0_4] : memref<32x32xf32, #tpu.memory_space<vmem>>, vector<32x32xf32>
    %cst = arith.constant dense<0.000000e+00> : vector<16xf32>
    %9 = vector.multi_reduction <add>, %0, %cst [1] : vector<16x32xf32> to vector<16xf32>
    %10 = vector.shape_cast %9 : vector<16xf32> to vector<16x1xf32>
    %cst_5 = arith.constant 3.200000e+01 : f32
    %11 = vector.broadcast %cst_5 : f32 to vector<16x1xf32>
    %12 = arith.divf %10, %11 : vector<16x1xf32>
    %13 = vector.broadcast %12 : vector<16x1xf32> to vector<16x32xf32>
    %14 = arith.subf %0, %13 : vector<16x32xf32>
    %15 = arith.mulf %14, %14 : vector<16x32xf32>
    %cst_6 = arith.constant dense<0.000000e+00> : vector<16xf32>
    %16 = vector.multi_reduction <add>, %15, %cst_6 [1] : vector<16x32xf32> to vector<16xf32>
    %17 = vector.shape_cast %16 : vector<16xf32> to vector<16x1xf32>
    %cst_7 = arith.constant 3.200000e+01 : f32
    %18 = vector.broadcast %cst_7 : f32 to vector<16x1xf32>
    %19 = arith.divf %17, %18 : vector<16x1xf32>
    %cst_8 = arith.constant 9.99999997E-7 : f32
    %20 = vector.broadcast %cst_8 : f32 to vector<16x1xf32>
    %21 = arith.addf %19, %20 : vector<16x1xf32>
    %22 = math.rsqrt %21 : vector<16x1xf32>
    %23 = vector.broadcast %22 : vector<16x1xf32> to vector<16x32xf32>
    %24 = arith.mulf %14, %23 : vector<16x32xf32>
    %25 = vector.broadcast %2 : vector<1x32xf32> to vector<16x32xf32>
    %26 = arith.mulf %24, %25 : vector<16x32xf32>
    %27 = vector.broadcast %3 : vector<1x32xf32> to vector<16x32xf32>
    %28 = arith.addf %26, %27 : vector<16x32xf32>
    %c0_9 = arith.constant 0 : index
    %c0_10 = arith.constant 0 : index
    %29 = vector.load %arg1[%c0_9, %c0_10] : memref<32x96xf32, #tpu.memory_space<vmem>>, vector<32x96xf32>
    %cst_11 = arith.constant dense<0.000000e+00> : vector<16x96xf32>
    %30 = tpu.matmul %28, %29, %cst_11 {dimension_numbers = #tpu.dot_dimension_numbers<[1], [0], [0], [1], [0, 0, 1, 1], [], []>} : vector<16x32xf32>, vector<32x96xf32>, vector<16x96xf32> -> vector<16x96xf32>
    %c0_12 = arith.constant 0 : index
    %c0_13 = arith.constant 0 : index
    %31 = vector.load %arg2[%c0_12, %c0_13] : memref<1x96xf32, #tpu.memory_space<vmem>>, vector<1x96xf32>
    %32 = vector.broadcast %31 : vector<1x96xf32> to vector<16x96xf32>
    %33 = arith.addf %30, %32 : vector<16x96xf32>
    %34 = vector.extract_strided_slice %33 {offsets = [0, 0], sizes = [16, 64], strides = [1, 1]} : vector<16x96xf32> to vector<16x64xf32>
    %c0_14 = arith.constant 0 : index
    %c0_15 = arith.constant 0 : index
    %35 = vector.load %arg9[%c0_14, %c0_15] : memref<64x64xf32, #tpu.memory_space<vmem>>, vector<64x64xf32>
    %cst_16 = arith.constant dense<0.000000e+00> : vector<16x64xf32>
    %36 = tpu.matmul %34, %35, %cst_16 {dimension_numbers = #tpu.dot_dimension_numbers<[1], [0], [0], [1], [0, 0, 1, 1], [], []>} : vector<16x64xf32>, vector<64x64xf32>, vector<16x64xf32> -> vector<16x64xf32>
    %37 = arith.subf %34, %36 : vector<16x64xf32>
    %38 = arith.mulf %37, %37 : vector<16x64xf32>
    %cst_17 = arith.constant dense<0.000000e+00> : vector<16x64xf32>
    %39 = tpu.matmul %38, %35, %cst_17 {dimension_numbers = #tpu.dot_dimension_numbers<[1], [0], [0], [1], [0, 0, 1, 1], [], []>} : vector<16x64xf32>, vector<64x64xf32>, vector<16x64xf32> -> vector<16x64xf32>
    %cst_18 = arith.constant 9.99999974E-6 : f32
    %40 = vector.broadcast %cst_18 : f32 to vector<16x64xf32>
    %41 = arith.addf %39, %40 : vector<16x64xf32>
    %42 = math.rsqrt %41 : vector<16x64xf32>
    %43 = arith.mulf %37, %42 : vector<16x64xf32>
    %c0_19 = arith.constant 0 : index
    %c0_20 = arith.constant 0 : index
    %44 = vector.load %arg8[%c0_19, %c0_20] : memref<2x64xf32, #tpu.memory_space<vmem>>, vector<1x64xf32>
    %45 = vector.broadcast %44 : vector<1x64xf32> to vector<16x64xf32>
    %46 = arith.mulf %43, %45 : vector<16x64xf32>
    %c1 = arith.constant 1 : index
    %c0_21 = arith.constant 0 : index
    %47 = vector.load %arg8[%c1, %c0_21] : memref<2x64xf32, #tpu.memory_space<vmem>>, vector<1x64xf32>
    %48 = vector.broadcast %47 : vector<1x64xf32> to vector<16x64xf32>
    %49 = arith.addf %46, %48 : vector<16x64xf32>
    %50 = vector.extract_strided_slice %33 {offsets = [0, 64], sizes = [16, 32], strides = [1, 1]} : vector<16x96xf32> to vector<16x32xf32>
    %cst_22 = arith.constant 0.000000e+00 : f32
    %51 = vector.broadcast %cst_22 : f32 to vector<8x32xf32>
    %52 = vector.extract_strided_slice %49 {offsets = [0, 0], sizes = [8, 8], strides = [1, 1]} : vector<16x64xf32> to vector<8x8xf32>
    %53 = vector.extract_strided_slice %49 {offsets = [0, 32], sizes = [8, 8], strides = [1, 1]} : vector<16x64xf32> to vector<8x8xf32>
    %54 = vector.extract_strided_slice %50 {offsets = [0, 0], sizes = [8, 8], strides = [1, 1]} : vector<16x32xf32> to vector<8x8xf32>
    %cst_23 = arith.constant dense<0.000000e+00> : vector<8x8xf32>
    %55 = tpu.matmul %52, %53, %cst_23 {dimension_numbers = #tpu.dot_dimension_numbers<[1], [1], [0], [0], [0, 0, 1, 0], [], []>} : vector<8x8xf32>, vector<8x8xf32>, vector<8x8xf32> -> vector<8x8xf32>
    %cst_24 = arith.constant dense<0xFF800000> : vector<8xf32>
    %56 = vector.multi_reduction <maximumf>, %55, %cst_24 [1] : vector<8x8xf32> to vector<8xf32>
    %57 = vector.shape_cast %56 : vector<8xf32> to vector<8x1xf32>
    %58 = vector.broadcast %57 : vector<8x1xf32> to vector<8x8xf32>
    %59 = arith.subf %55, %58 : vector<8x8xf32>
    %60 = math.exp %59 : vector<8x8xf32>
    %cst_25 = arith.constant dense<0.000000e+00> : vector<8xf32>
    %61 = vector.multi_reduction <add>, %60, %cst_25 [1] : vector<8x8xf32> to vector<8xf32>
    %62 = vector.shape_cast %61 : vector<8xf32> to vector<8x1xf32>
    %63 = vector.broadcast %62 : vector<8x1xf32> to vector<8x8xf32>
    %64 = arith.divf %60, %63 : vector<8x8xf32>
    %c0_26 = arith.constant 0 : index
    %c0_27 = arith.constant 0 : index
    %c0_28 = arith.constant 0 : index
    %65 = vector.load %arg11[%c0_26, %c0_27, %c0_28] : memref<8x8x8xf32, #tpu.memory_space<vmem>>, vector<1x8x8xf32>
    %66 = vector.shape_cast %65 : vector<1x8x8xf32> to vector<8x8xf32>
    %67 = vector.shape_cast %64 : vector<8x8xf32> to vector<1x8x8xf32>
    tpu.vector_store %arg11[%c0_26, %c0_27, %c0_28], %67 {strides = array<i32>} : memref<8x8x8xf32, #tpu.memory_space<vmem>>, vector<1x8x8xf32>,
    %cst_29 = arith.constant dense<0.000000e+00> : vector<8x8xf32>
    %68 = tpu.matmul %64, %54, %cst_29 {dimension_numbers = #tpu.dot_dimension_numbers<[1], [0], [0], [1], [0, 0, 1, 1], [], []>} : vector<8x8xf32>, vector<8x8xf32>, vector<8x8xf32> -> vector<8x8xf32>
    %69 = vector.extract_strided_slice %8 {offsets = [0, 0], sizes = [8, 32], strides = [1, 1]} : vector<32x32xf32> to vector<8x32xf32>
    %cst_30 = arith.constant dense<0.000000e+00> : vector<8x32xf32>
    %70 = tpu.matmul %68, %69, %cst_30 {dimension_numbers = #tpu.dot_dimension_numbers<[1], [0], [0], [1], [0, 0, 1, 1], [], []>} : vector<8x8xf32>, vector<8x32xf32>, vector<8x32xf32> -> vector<8x32xf32>
    %71 = arith.addf %51, %70 : vector<8x32xf32>
    %72 = vector.extract_strided_slice %49 {offsets = [0, 8], sizes = [8, 8], strides = [1, 1]} : vector<16x64xf32> to vector<8x8xf32>
    %73 = vector.extract_strided_slice %49 {offsets = [0, 40], sizes = [8, 8], strides = [1, 1]} : vector<16x64xf32> to vector<8x8xf32>
    %74 = vector.extract_strided_slice %50 {offsets = [0, 8], sizes = [8, 8], strides = [1, 1]} : vector<16x32xf32> to vector<8x8xf32>
    %cst_31 = arith.constant dense<0.000000e+00> : vector<8x8xf32>
    %75 = tpu.matmul %72, %73, %cst_31 {dimension_numbers = #tpu.dot_dimension_numbers<[1], [1], [0], [0], [0, 0, 1, 0], [], []>} : vector<8x8xf32>, vector<8x8xf32>, vector<8x8xf32> -> vector<8x8xf32>
    %cst_32 = arith.constant dense<0xFF800000> : vector<8xf32>
    %76 = vector.multi_reduction <maximumf>, %75, %cst_32 [1] : vector<8x8xf32> to vector<8xf32>
    %77 = vector.shape_cast %76 : vector<8xf32> to vector<8x1xf32>
    %78 = vector.broadcast %77 : vector<8x1xf32> to vector<8x8xf32>
    %79 = arith.subf %75, %78 : vector<8x8xf32>
    %80 = math.exp %79 : vector<8x8xf32>
    %cst_33 = arith.constant dense<0.000000e+00> : vector<8xf32>
    %81 = vector.multi_reduction <add>, %80, %cst_33 [1] : vector<8x8xf32> to vector<8xf32>
    %82 = vector.shape_cast %81 : vector<8xf32> to vector<8x1xf32>
    %83 = vector.broadcast %82 : vector<8x1xf32> to vector<8x8xf32>
    %84 = arith.divf %80, %83 : vector<8x8xf32>
    %c1_34 = arith.constant 1 : index
    %c0_35 = arith.constant 0 : index
    %c0_36 = arith.constant 0 : index
    %85 = vector.load %arg11[%c1_34, %c0_35, %c0_36] : memref<8x8x8xf32, #tpu.memory_space<vmem>>, vector<1x8x8xf32>
    %86 = vector.shape_cast %85 : vector<1x8x8xf32> to vector<8x8xf32>
    %87 = vector.shape_cast %84 : vector<8x8xf32> to vector<1x8x8xf32>
    tpu.vector_store %arg11[%c1_34, %c0_35, %c0_36], %87 {strides = array<i32>} : memref<8x8x8xf32, #tpu.memory_space<vmem>>, vector<1x8x8xf32>,
    %cst_37 = arith.constant dense<0.000000e+00> : vector<8x8xf32>
    %88 = tpu.matmul %84, %74, %cst_37 {dimension_numbers = #tpu.dot_dimension_numbers<[1], [0], [0], [1], [0, 0, 1, 1], [], []>} : vector<8x8xf32>, vector<8x8xf32>, vector<8x8xf32> -> vector<8x8xf32>
    %89 = vector.extract_strided_slice %8 {offsets = [8, 0], sizes = [8, 32], strides = [1, 1]} : vector<32x32xf32> to vector<8x32xf32>
    %cst_38 = arith.constant dense<0.000000e+00> : vector<8x32xf32>
    %90 = tpu.matmul %88, %89, %cst_38 {dimension_numbers = #tpu.dot_dimension_numbers<[1], [0], [0], [1], [0, 0, 1, 1], [], []>} : vector<8x8xf32>, vector<8x32xf32>, vector<8x32xf32> -> vector<8x32xf32>
    %91 = arith.addf %71, %90 : vector<8x32xf32>
    %92 = vector.extract_strided_slice %49 {offsets = [0, 16], sizes = [8, 8], strides = [1, 1]} : vector<16x64xf32> to vector<8x8xf32>
    %93 = vector.extract_strided_slice %49 {offsets = [0, 48], sizes = [8, 8], strides = [1, 1]} : vector<16x64xf32> to vector<8x8xf32>
    %94 = vector.extract_strided_slice %50 {offsets = [0, 16], sizes = [8, 8], strides = [1, 1]} : vector<16x32xf32> to vector<8x8xf32>
    %cst_39 = arith.constant dense<0.000000e+00> : vector<8x8xf32>
    %95 = tpu.matmul %92, %93, %cst_39 {dimension_numbers = #tpu.dot_dimension_numbers<[1], [1], [0], [0], [0, 0, 1, 0], [], []>} : vector<8x8xf32>, vector<8x8xf32>, vector<8x8xf32> -> vector<8x8xf32>
    %cst_40 = arith.constant dense<0xFF800000> : vector<8xf32>
    %96 = vector.multi_reduction <maximumf>, %95, %cst_40 [1] : vector<8x8xf32> to vector<8xf32>
    %97 = vector.shape_cast %96 : vector<8xf32> to vector<8x1xf32>
    %98 = vector.broadcast %97 : vector<8x1xf32> to vector<8x8xf32>
    %99 = arith.subf %95, %98 : vector<8x8xf32>
    %100 = math.exp %99 : vector<8x8xf32>
    %cst_41 = arith.constant dense<0.000000e+00> : vector<8xf32>
    %101 = vector.multi_reduction <add>, %100, %cst_41 [1] : vector<8x8xf32> to vector<8xf32>
    %102 = vector.shape_cast %101 : vector<8xf32> to vector<8x1xf32>
    %103 = vector.broadcast %102 : vector<8x1xf32> to vector<8x8xf32>
    %104 = arith.divf %100, %103 : vector<8x8xf32>
    %c2 = arith.constant 2 : index
    %c0_42 = arith.constant 0 : index
    %c0_43 = arith.constant 0 : index
    %105 = vector.load %arg11[%c2, %c0_42, %c0_43] : memref<8x8x8xf32, #tpu.memory_space<vmem>>, vector<1x8x8xf32>
    %106 = vector.shape_cast %105 : vector<1x8x8xf32> to vector<8x8xf32>
    %107 = vector.shape_cast %104 : vector<8x8xf32> to vector<1x8x8xf32>
    tpu.vector_store %arg11[%c2, %c0_42, %c0_43], %107 {strides = array<i32>} : memref<8x8x8xf32, #tpu.memory_space<vmem>>, vector<1x8x8xf32>,
    %cst_44 = arith.constant dense<0.000000e+00> : vector<8x8xf32>
    %108 = tpu.matmul %104, %94, %cst_44 {dimension_numbers = #tpu.dot_dimension_numbers<[1], [0], [0], [1], [0, 0, 1, 1], [], []>} : vector<8x8xf32>, vector<8x8xf32>, vector<8x8xf32> -> vector<8x8xf32>
    %109 = vector.extract_strided_slice %8 {offsets = [16, 0], sizes = [8, 32], strides = [1, 1]} : vector<32x32xf32> to vector<8x32xf32>
    %cst_45 = arith.constant dense<0.000000e+00> : vector<8x32xf32>
    %110 = tpu.matmul %108, %109, %cst_45 {dimension_numbers = #tpu.dot_dimension_numbers<[1], [0], [0], [1], [0, 0, 1, 1], [], []>} : vector<8x8xf32>, vector<8x32xf32>, vector<8x32xf32> -> vector<8x32xf32>
    %111 = arith.addf %91, %110 : vector<8x32xf32>
    %112 = vector.extract_strided_slice %49 {offsets = [0, 24], sizes = [8, 8], strides = [1, 1]} : vector<16x64xf32> to vector<8x8xf32>
    %113 = vector.extract_strided_slice %49 {offsets = [0, 56], sizes = [8, 8], strides = [1, 1]} : vector<16x64xf32> to vector<8x8xf32>
    %114 = vector.extract_strided_slice %50 {offsets = [0, 24], sizes = [8, 8], strides = [1, 1]} : vector<16x32xf32> to vector<8x8xf32>
    %cst_46 = arith.constant dense<0.000000e+00> : vector<8x8xf32>
    %115 = tpu.matmul %112, %113, %cst_46 {dimension_numbers = #tpu.dot_dimension_numbers<[1], [1], [0], [0], [0, 0, 1, 0], [], []>} : vector<8x8xf32>, vector<8x8xf32>, vector<8x8xf32> -> vector<8x8xf32>
    %cst_47 = arith.constant dense<0xFF800000> : vector<8xf32>
    %116 = vector.multi_reduction <maximumf>, %115, %cst_47 [1] : vector<8x8xf32> to vector<8xf32>
    %117 = vector.shape_cast %116 : vector<8xf32> to vector<8x1xf32>
    %118 = vector.broadcast %117 : vector<8x1xf32> to vector<8x8xf32>
    %119 = arith.subf %115, %118 : vector<8x8xf32>
    %120 = math.exp %119 : vector<8x8xf32>
    %cst_48 = arith.constant dense<0.000000e+00> : vector<8xf32>
    %121 = vector.multi_reduction <add>, %120, %cst_48 [1] : vector<8x8xf32> to vector<8xf32>
    %122 = vector.shape_cast %121 : vector<8xf32> to vector<8x1xf32>
    %123 = vector.broadcast %122 : vector<8x1xf32> to vector<8x8xf32>
    %124 = arith.divf %120, %123 : vector<8x8xf32>
    %c3 = arith.constant 3 : index
    %c0_49 = arith.constant 0 : index
    %c0_50 = arith.constant 0 : index
    %125 = vector.load %arg11[%c3, %c0_49, %c0_50] : memref<8x8x8xf32, #tpu.memory_space<vmem>>, vector<1x8x8xf32>
    %126 = vector.shape_cast %125 : vector<1x8x8xf32> to vector<8x8xf32>
    %127 = vector.shape_cast %124 : vector<8x8xf32> to vector<1x8x8xf32>
    tpu.vector_store %arg11[%c3, %c0_49, %c0_50], %127 {strides = array<i32>} : memref<8x8x8xf32, #tpu.memory_space<vmem>>, vector<1x8x8xf32>,
    %cst_51 = arith.constant dense<0.000000e+00> : vector<8x8xf32>
    %128 = tpu.matmul %124, %114, %cst_51 {dimension_numbers = #tpu.dot_dimension_numbers<[1], [0], [0], [1], [0, 0, 1, 1], [], []>} : vector<8x8xf32>, vector<8x8xf32>, vector<8x8xf32> -> vector<8x8xf32>
    %129 = vector.extract_strided_slice %8 {offsets = [24, 0], sizes = [8, 32], strides = [1, 1]} : vector<32x32xf32> to vector<8x32xf32>
    %cst_52 = arith.constant dense<0.000000e+00> : vector<8x32xf32>
    %130 = tpu.matmul %128, %129, %cst_52 {dimension_numbers = #tpu.dot_dimension_numbers<[1], [0], [0], [1], [0, 0, 1, 1], [], []>} : vector<8x8xf32>, vector<8x32xf32>, vector<8x32xf32> -> vector<8x32xf32>
    %131 = arith.addf %111, %130 : vector<8x32xf32>
    %132 = vector.extract_strided_slice %0 {offsets = [0, 0], sizes = [8, 32], strides = [1, 1]} : vector<16x32xf32> to vector<8x32xf32>
    %133 = arith.addf %132, %131 : vector<8x32xf32>
    %134 = vector.broadcast %6 : vector<1x32xf32> to vector<8x32xf32>
    %135 = arith.addf %133, %134 : vector<8x32xf32>
    %cst_53 = arith.constant 0.000000e+00 : f32
    %136 = vector.broadcast %cst_53 : f32 to vector<8x32xf32>
    %137 = vector.extract_strided_slice %49 {offsets = [8, 0], sizes = [8, 8], strides = [1, 1]} : vector<16x64xf32> to vector<8x8xf32>
    %138 = vector.extract_strided_slice %49 {offsets = [8, 32], sizes = [8, 8], strides = [1, 1]} : vector<16x64xf32> to vector<8x8xf32>
    %139 = vector.extract_strided_slice %50 {offsets = [8, 0], sizes = [8, 8], strides = [1, 1]} : vector<16x32xf32> to vector<8x8xf32>
    %cst_54 = arith.constant dense<0.000000e+00> : vector<8x8xf32>
    %140 = tpu.matmul %137, %138, %cst_54 {dimension_numbers = #tpu.dot_dimension_numbers<[1], [1], [0], [0], [0, 0, 1, 0], [], []>} : vector<8x8xf32>, vector<8x8xf32>, vector<8x8xf32> -> vector<8x8xf32>
    %cst_55 = arith.constant dense<0xFF800000> : vector<8xf32>
    %141 = vector.multi_reduction <maximumf>, %140, %cst_55 [1] : vector<8x8xf32> to vector<8xf32>
    %142 = vector.shape_cast %141 : vector<8xf32> to vector<8x1xf32>
    %143 = vector.broadcast %142 : vector<8x1xf32> to vector<8x8xf32>
    %144 = arith.subf %140, %143 : vector<8x8xf32>
    %145 = math.exp %144 : vector<8x8xf32>
    %cst_56 = arith.constant dense<0.000000e+00> : vector<8xf32>
    %146 = vector.multi_reduction <add>, %145, %cst_56 [1] : vector<8x8xf32> to vector<8xf32>
    %147 = vector.shape_cast %146 : vector<8xf32> to vector<8x1xf32>
    %148 = vector.broadcast %147 : vector<8x1xf32> to vector<8x8xf32>
    %149 = arith.divf %145, %148 : vector<8x8xf32>
    %c4 = arith.constant 4 : index
    %c0_57 = arith.constant 0 : index
    %c0_58 = arith.constant 0 : index
    %150 = vector.load %arg11[%c4, %c0_57, %c0_58] : memref<8x8x8xf32, #tpu.memory_space<vmem>>, vector<1x8x8xf32>
    %151 = vector.shape_cast %150 : vector<1x8x8xf32> to vector<8x8xf32>
    %152 = vector.shape_cast %149 : vector<8x8xf32> to vector<1x8x8xf32>
    tpu.vector_store %arg11[%c4, %c0_57, %c0_58], %152 {strides = array<i32>} : memref<8x8x8xf32, #tpu.memory_space<vmem>>, vector<1x8x8xf32>,
    %cst_59 = arith.constant dense<0.000000e+00> : vector<8x8xf32>
    %153 = tpu.matmul %149, %139, %cst_59 {dimension_numbers = #tpu.dot_dimension_numbers<[1], [0], [0], [1], [0, 0, 1, 1], [], []>} : vector<8x8xf32>, vector<8x8xf32>, vector<8x8xf32> -> vector<8x8xf32>
    %154 = vector.extract_strided_slice %8 {offsets = [0, 0], sizes = [8, 32], strides = [1, 1]} : vector<32x32xf32> to vector<8x32xf32>
    %cst_60 = arith.constant dense<0.000000e+00> : vector<8x32xf32>
    %155 = tpu.matmul %153, %154, %cst_60 {dimension_numbers = #tpu.dot_dimension_numbers<[1], [0], [0], [1], [0, 0, 1, 1], [], []>} : vector<8x8xf32>, vector<8x32xf32>, vector<8x32xf32> -> vector<8x32xf32>
    %156 = arith.addf %136, %155 : vector<8x32xf32>
    %157 = vector.extract_strided_slice %49 {offsets = [8, 8], sizes = [8, 8], strides = [1, 1]} : vector<16x64xf32> to vector<8x8xf32>
    %158 = vector.extract_strided_slice %49 {offsets = [8, 40], sizes = [8, 8], strides = [1, 1]} : vector<16x64xf32> to vector<8x8xf32>
    %159 = vector.extract_strided_slice %50 {offsets = [8, 8], sizes = [8, 8], strides = [1, 1]} : vector<16x32xf32> to vector<8x8xf32>
    %cst_61 = arith.constant dense<0.000000e+00> : vector<8x8xf32>
    %160 = tpu.matmul %157, %158, %cst_61 {dimension_numbers = #tpu.dot_dimension_numbers<[1], [1], [0], [0], [0, 0, 1, 0], [], []>} : vector<8x8xf32>, vector<8x8xf32>, vector<8x8xf32> -> vector<8x8xf32>
    %cst_62 = arith.constant dense<0xFF800000> : vector<8xf32>
    %161 = vector.multi_reduction <maximumf>, %160, %cst_62 [1] : vector<8x8xf32> to vector<8xf32>
    %162 = vector.shape_cast %161 : vector<8xf32> to vector<8x1xf32>
    %163 = vector.broadcast %162 : vector<8x1xf32> to vector<8x8xf32>
    %164 = arith.subf %160, %163 : vector<8x8xf32>
    %165 = math.exp %164 : vector<8x8xf32>
    %cst_63 = arith.constant dense<0.000000e+00> : vector<8xf32>
    %166 = vector.multi_reduction <add>, %165, %cst_63 [1] : vector<8x8xf32> to vector<8xf32>
    %167 = vector.shape_cast %166 : vector<8xf32> to vector<8x1xf32>
    %168 = vector.broadcast %167 : vector<8x1xf32> to vector<8x8xf32>
    %169 = arith.divf %165, %168 : vector<8x8xf32>
    %c5 = arith.constant 5 : index
    %c0_64 = arith.constant 0 : index
    %c0_65 = arith.constant 0 : index
    %170 = vector.load %arg11[%c5, %c0_64, %c0_65] : memref<8x8x8xf32, #tpu.memory_space<vmem>>, vector<1x8x8xf32>
    %171 = vector.shape_cast %170 : vector<1x8x8xf32> to vector<8x8xf32>
    %172 = vector.shape_cast %169 : vector<8x8xf32> to vector<1x8x8xf32>
    tpu.vector_store %arg11[%c5, %c0_64, %c0_65], %172 {strides = array<i32>} : memref<8x8x8xf32, #tpu.memory_space<vmem>>, vector<1x8x8xf32>,
    %cst_66 = arith.constant dense<0.000000e+00> : vector<8x8xf32>
    %173 = tpu.matmul %169, %159, %cst_66 {dimension_numbers = #tpu.dot_dimension_numbers<[1], [0], [0], [1], [0, 0, 1, 1], [], []>} : vector<8x8xf32>, vector<8x8xf32>, vector<8x8xf32> -> vector<8x8xf32>
    %174 = vector.extract_strided_slice %8 {offsets = [8, 0], sizes = [8, 32], strides = [1, 1]} : vector<32x32xf32> to vector<8x32xf32>
    %cst_67 = arith.constant dense<0.000000e+00> : vector<8x32xf32>
    %175 = tpu.matmul %173, %174, %cst_67 {dimension_numbers = #tpu.dot_dimension_numbers<[1], [0], [0], [1], [0, 0, 1, 1], [], []>} : vector<8x8xf32>, vector<8x32xf32>, vector<8x32xf32> -> vector<8x32xf32>
    %176 = arith.addf %156, %175 : vector<8x32xf32>
    %177 = vector.extract_strided_slice %49 {offsets = [8, 16], sizes = [8, 8], strides = [1, 1]} : vector<16x64xf32> to vector<8x8xf32>
    %178 = vector.extract_strided_slice %49 {offsets = [8, 48], sizes = [8, 8], strides = [1, 1]} : vector<16x64xf32> to vector<8x8xf32>
    %179 = vector.extract_strided_slice %50 {offsets = [8, 16], sizes = [8, 8], strides = [1, 1]} : vector<16x32xf32> to vector<8x8xf32>
    %cst_68 = arith.constant dense<0.000000e+00> : vector<8x8xf32>
    %180 = tpu.matmul %177, %178, %cst_68 {dimension_numbers = #tpu.dot_dimension_numbers<[1], [1], [0], [0], [0, 0, 1, 0], [], []>} : vector<8x8xf32>, vector<8x8xf32>, vector<8x8xf32> -> vector<8x8xf32>
    %cst_69 = arith.constant dense<0xFF800000> : vector<8xf32>
    %181 = vector.multi_reduction <maximumf>, %180, %cst_69 [1] : vector<8x8xf32> to vector<8xf32>
    %182 = vector.shape_cast %181 : vector<8xf32> to vector<8x1xf32>
    %183 = vector.broadcast %182 : vector<8x1xf32> to vector<8x8xf32>
    %184 = arith.subf %180, %183 : vector<8x8xf32>
    %185 = math.exp %184 : vector<8x8xf32>
    %cst_70 = arith.constant dense<0.000000e+00> : vector<8xf32>
    %186 = vector.multi_reduction <add>, %185, %cst_70 [1] : vector<8x8xf32> to vector<8xf32>
    %187 = vector.shape_cast %186 : vector<8xf32> to vector<8x1xf32>
    %188 = vector.broadcast %187 : vector<8x1xf32> to vector<8x8xf32>
    %189 = arith.divf %185, %188 : vector<8x8xf32>
    %c6 = arith.constant 6 : index
    %c0_71 = arith.constant 0 : index
    %c0_72 = arith.constant 0 : index
    %190 = vector.load %arg11[%c6, %c0_71, %c0_72] : memref<8x8x8xf32, #tpu.memory_space<vmem>>, vector<1x8x8xf32>
    %191 = vector.shape_cast %190 : vector<1x8x8xf32> to vector<8x8xf32>
    %192 = vector.shape_cast %189 : vector<8x8xf32> to vector<1x8x8xf32>
    tpu.vector_store %arg11[%c6, %c0_71, %c0_72], %192 {strides = array<i32>} : memref<8x8x8xf32, #tpu.memory_space<vmem>>, vector<1x8x8xf32>,
    %cst_73 = arith.constant dense<0.000000e+00> : vector<8x8xf32>
    %193 = tpu.matmul %189, %179, %cst_73 {dimension_numbers = #tpu.dot_dimension_numbers<[1], [0], [0], [1], [0, 0, 1, 1], [], []>} : vector<8x8xf32>, vector<8x8xf32>, vector<8x8xf32> -> vector<8x8xf32>
    %194 = vector.extract_strided_slice %8 {offsets = [16, 0], sizes = [8, 32], strides = [1, 1]} : vector<32x32xf32> to vector<8x32xf32>
    %cst_74 = arith.constant dense<0.000000e+00> : vector<8x32xf32>
    %195 = tpu.matmul %193, %194, %cst_74 {dimension_numbers = #tpu.dot_dimension_numbers<[1], [0], [0], [1], [0, 0, 1, 1], [], []>} : vector<8x8xf32>, vector<8x32xf32>, vector<8x32xf32> -> vector<8x32xf32>
    %196 = arith.addf %176, %195 : vector<8x32xf32>
    %197 = vector.extract_strided_slice %49 {offsets = [8, 24], sizes = [8, 8], strides = [1, 1]} : vector<16x64xf32> to vector<8x8xf32>
    %198 = vector.extract_strided_slice %49 {offsets = [8, 56], sizes = [8, 8], strides = [1, 1]} : vector<16x64xf32> to vector<8x8xf32>
    %199 = vector.extract_strided_slice %50 {offsets = [8, 24], sizes = [8, 8], strides = [1, 1]} : vector<16x32xf32> to vector<8x8xf32>
    %cst_75 = arith.constant dense<0.000000e+00> : vector<8x8xf32>
    %200 = tpu.matmul %197, %198, %cst_75 {dimension_numbers = #tpu.dot_dimension_numbers<[1], [1], [0], [0], [0, 0, 1, 0], [], []>} : vector<8x8xf32>, vector<8x8xf32>, vector<8x8xf32> -> vector<8x8xf32>
    %cst_76 = arith.constant dense<0xFF800000> : vector<8xf32>
    %201 = vector.multi_reduction <maximumf>, %200, %cst_76 [1] : vector<8x8xf32> to vector<8xf32>
    %202 = vector.shape_cast %201 : vector<8xf32> to vector<8x1xf32>
    %203 = vector.broadcast %202 : vector<8x1xf32> to vector<8x8xf32>
    %204 = arith.subf %200, %203 : vector<8x8xf32>
    %205 = math.exp %204 : vector<8x8xf32>
    %cst_77 = arith.constant dense<0.000000e+00> : vector<8xf32>
    %206 = vector.multi_reduction <add>, %205, %cst_77 [1] : vector<8x8xf32> to vector<8xf32>
    %207 = vector.shape_cast %206 : vector<8xf32> to vector<8x1xf32>
    %208 = vector.broadcast %207 : vector<8x1xf32> to vector<8x8xf32>
    %209 = arith.divf %205, %208 : vector<8x8xf32>
    %c7 = arith.constant 7 : index
    %c0_78 = arith.constant 0 : index
    %c0_79 = arith.constant 0 : index
    %210 = vector.load %arg11[%c7, %c0_78, %c0_79] : memref<8x8x8xf32, #tpu.memory_space<vmem>>, vector<1x8x8xf32>
    %211 = vector.shape_cast %210 : vector<1x8x8xf32> to vector<8x8xf32>
    %212 = vector.shape_cast %209 : vector<8x8xf32> to vector<1x8x8xf32>
    tpu.vector_store %arg11[%c7, %c0_78, %c0_79], %212 {strides = array<i32>} : memref<8x8x8xf32, #tpu.memory_space<vmem>>, vector<1x8x8xf32>,
    %cst_80 = arith.constant dense<0.000000e+00> : vector<8x8xf32>
    %213 = tpu.matmul %209, %199, %cst_80 {dimension_numbers = #tpu.dot_dimension_numbers<[1], [0], [0], [1], [0, 0, 1, 1], [], []>} : vector<8x8xf32>, vector<8x8xf32>, vector<8x8xf32> -> vector<8x8xf32>
    %214 = vector.extract_strided_slice %8 {offsets = [24, 0], sizes = [8, 32], strides = [1, 1]} : vector<32x32xf32> to vector<8x32xf32>
    %cst_81 = arith.constant dense<0.000000e+00> : vector<8x32xf32>
    %215 = tpu.matmul %213, %214, %cst_81 {dimension_numbers = #tpu.dot_dimension_numbers<[1], [0], [0], [1], [0, 0, 1, 1], [], []>} : vector<8x8xf32>, vector<8x32xf32>, vector<8x32xf32> -> vector<8x32xf32>
    %216 = arith.addf %196, %215 : vector<8x32xf32>
    %217 = vector.extract_strided_slice %0 {offsets = [8, 0], sizes = [8, 32], strides = [1, 1]} : vector<16x32xf32> to vector<8x32xf32>
    %218 = arith.addf %217, %216 : vector<8x32xf32>
    %219 = vector.broadcast %6 : vector<1x32xf32> to vector<8x32xf32>
    %220 = arith.addf %218, %219 : vector<8x32xf32>
    %221 = tpu.concatenate %135, %220 in 0 : vector<8x32xf32>, vector<8x32xf32> -> vector<16x32xf32>
    %cst_82 = arith.constant dense<0.000000e+00> : vector<16xf32>
    %222 = vector.multi_reduction <add>, %221, %cst_82 [1] : vector<16x32xf32> to vector<16xf32>
    %223 = vector.shape_cast %222 : vector<16xf32> to vector<16x1xf32>
    %cst_83 = arith.constant 3.200000e+01 : f32
    %224 = vector.broadcast %cst_83 : f32 to vector<16x1xf32>
    %225 = arith.divf %223, %224 : vector<16x1xf32>
    %226 = vector.broadcast %225 : vector<16x1xf32> to vector<16x32xf32>
    %227 = arith.subf %221, %226 : vector<16x32xf32>
    %228 = arith.mulf %227, %227 : vector<16x32xf32>
    %cst_84 = arith.constant dense<0.000000e+00> : vector<16xf32>
    %229 = vector.multi_reduction <add>, %228, %cst_84 [1] : vector<16x32xf32> to vector<16xf32>
    %230 = vector.shape_cast %229 : vector<16xf32> to vector<16x1xf32>
    %cst_85 = arith.constant 3.200000e+01 : f32
    %231 = vector.broadcast %cst_85 : f32 to vector<16x1xf32>
    %232 = arith.divf %230, %231 : vector<16x1xf32>
    %cst_86 = arith.constant 9.99999997E-7 : f32
    %233 = vector.broadcast %cst_86 : f32 to vector<16x1xf32>
    %234 = arith.addf %232, %233 : vector<16x1xf32>
    %235 = math.rsqrt %234 : vector<16x1xf32>
    %236 = vector.broadcast %235 : vector<16x1xf32> to vector<16x32xf32>
    %237 = arith.mulf %227, %236 : vector<16x32xf32>
    %238 = vector.broadcast %4 : vector<1x32xf32> to vector<16x32xf32>
    %239 = arith.mulf %237, %238 : vector<16x32xf32>
    %240 = vector.broadcast %5 : vector<1x32xf32> to vector<16x32xf32>
    %241 = arith.addf %239, %240 : vector<16x32xf32>
    %c0_87 = arith.constant 0 : index
    %c0_88 = arith.constant 0 : index
    %242 = vector.load %arg4[%c0_87, %c0_88] : memref<32x64xf32, #tpu.memory_space<vmem>>, vector<32x64xf32>
    %cst_89 = arith.constant dense<0.000000e+00> : vector<16x64xf32>
    %243 = tpu.matmul %241, %242, %cst_89 {dimension_numbers = #tpu.dot_dimension_numbers<[1], [0], [0], [1], [0, 0, 1, 1], [], []>} : vector<16x32xf32>, vector<32x64xf32>, vector<16x64xf32> -> vector<16x64xf32>
    %c0_90 = arith.constant 0 : index
    %c0_91 = arith.constant 0 : index
    %244 = vector.load %arg5[%c0_90, %c0_91] : memref<1x64xf32, #tpu.memory_space<vmem>>, vector<1x64xf32>
    %245 = vector.broadcast %244 : vector<1x64xf32> to vector<16x64xf32>
    %246 = arith.addf %243, %245 : vector<16x64xf32>
    %cst_92 = arith.constant 5.000000e-01 : f32
    %247 = vector.broadcast %cst_92 : f32 to vector<16x64xf32>
    %248 = arith.mulf %247, %246 : vector<16x64xf32>
    %249 = arith.mulf %246, %246 : vector<16x64xf32>
    %250 = arith.mulf %249, %246 : vector<16x64xf32>
    %cst_93 = arith.constant 4.471500e-02 : f32
    %251 = vector.broadcast %cst_93 : f32 to vector<16x64xf32>
    %252 = arith.mulf %251, %250 : vector<16x64xf32>
    %253 = arith.addf %246, %252 : vector<16x64xf32>
    %cst_94 = arith.constant 0.797884583 : f32
    %254 = vector.broadcast %cst_94 : f32 to vector<16x64xf32>
    %255 = arith.mulf %254, %253 : vector<16x64xf32>
    %256 = math.tanh %255 : vector<16x64xf32>
    %cst_95 = arith.constant 1.000000e+00 : f32
    %257 = vector.broadcast %cst_95 : f32 to vector<16x64xf32>
    %258 = arith.addf %257, %256 : vector<16x64xf32>
    %259 = arith.mulf %248, %258 : vector<16x64xf32>
    %c0_96 = arith.constant 0 : index
    %c0_97 = arith.constant 0 : index
    %260 = vector.load %arg6[%c0_96, %c0_97] : memref<64x32xf32, #tpu.memory_space<vmem>>, vector<64x32xf32>
    %cst_98 = arith.constant dense<0.000000e+00> : vector<16x32xf32>
    %261 = tpu.matmul %259, %260, %cst_98 {dimension_numbers = #tpu.dot_dimension_numbers<[1], [0], [0], [1], [0, 0, 1, 1], [], []>} : vector<16x64xf32>, vector<64x32xf32>, vector<16x32xf32> -> vector<16x32xf32>
    %262 = arith.addf %221, %261 : vector<16x32xf32>
    %263 = vector.broadcast %7 : vector<1x32xf32> to vector<16x32xf32>
    %264 = arith.addf %262, %263 : vector<16x32xf32>
    %c0_99 = arith.constant 0 : index
    %c0_100 = arith.constant 0 : index
    %265 = vector.load %arg10[%c0_99, %c0_100] : memref<16x32xf32, #tpu.memory_space<vmem>>, vector<16x32xf32>
    tpu.vector_store %arg10[%c0_99, %c0_100], %264 {strides = array<i32>} : memref<16x32xf32, #tpu.memory_space<vmem>>, vector<16x32xf32>,
    return
  }
}

</mosaic_0001>

<llo_original>
// kernel: block_forward.1
$region0: #{block_forward.1}
  #allocation0 [shape = 'u32[]', space=smem, size = 0x4, offset = 0x4, fixed_abs, tag = 'smem constant byte address 0x4 - core index']
  #allocation1 [shape = 'u32[72,128]{1,0:T(1,128)}', space=vmem, size = 0x9000, scoped, tag = 'internal scratch']
  %s0 = inlined_call_operand.vmem [shape: f32[16,32], index: 0, kind: input, shape index: {}]
  %s1 = inlined_call_operand.vmem [shape: f32[32,96], index: 1, kind: input, shape index: {}]
  %s2 = inlined_call_operand.vmem [shape: f32[1,96], index: 2, kind: input, shape index: {}]
  %s3 = inlined_call_operand.vmem [shape: f32[32,32], index: 3, kind: input, shape index: {}]
  %s4 = inlined_call_operand.vmem [shape: f32[32,64], index: 4, kind: input, shape index: {}]
  %s5 = inlined_call_operand.vmem [shape: f32[1,64], index: 5, kind: input, shape index: {}]
  %s6 = inlined_call_operand.vmem [shape: f32[64,32], index: 6, kind: input, shape index: {}]
  %s7 = inlined_call_operand.vmem [shape: f32[6,32], index: 7, kind: input, shape index: {}]
  %s8 = inlined_call_operand.vmem [shape: f32[2,64], index: 8, kind: input, shape index: {}]
  %s9 = inlined_call_operand.vmem [shape: f32[64,64], index: 9, kind: input, shape index: {}]
  %s10 = inlined_call_operand.hbm [shape: f32[16,32], index: 10, kind: output, shape index: {0}]
  %s11 = inlined_call_operand.hbm [shape: f32[8,8,8], index: 11, kind: output, shape index: {1}]
  %12 = xla_tuple %s10, %s11
  %s13 = sld [smem:[#allocation0]]
  $region58: #{block_forward.1} parent=0
    _
  %s15 = ssub.s32 1, %s13
  %s16 = scalar_select 0, %s15, %s13
  $region1: #{block_forward.1} parent=0
    #allocation2 [shape = 'u8[8192]{0}', space=vmem, size = 0x2000, scoped, tag = 'output window, operand 0, single buffered']
    #allocation3 [shape = 's32[1]{0}', space=sflag, size = 0x4, scoped, tag = 'scoped memory for block_forward.1']
    #allocation4 [shape = 'u8[32768]{0}', space=vmem, size = 0x8000, scoped, tag = 'output window, operand 1, single buffered']
    #allocation5 [shape = 's32[1]{0}', space=sflag, size = 0x4, scoped, tag = 'scoped memory for block_forward.1']
    %17 = vsyncpa [#allocation3], 0
    %18 = vsyncpa [#allocation5], 0
    // Predicated region
    $region2: #{block_forward.1} parent=1 // pred_check
      _
    $region3: #{block_forward.1} parent=1 // pred_check_branch
      %20 = sbr.rel (0) target = $region5
    $region4: #{block_forward.1} parent=1 // pred_region
      _
    $region5: #{block_forward.1} parent=1 // pred_fallthru
      _
    // Predicated region
    $region6: #{block_forward.1} parent=1 // pred_check
      _
    $region7: #{block_forward.1} parent=1 // pred_check_branch
      %22 = sbr.rel (0) target = $region9
    $region8: #{block_forward.1} parent=1 // pred_region
      _
    $region9: #{block_forward.1} parent=1 // pred_fallthru
      _
    // Predicated region
    $region10: #{block_forward.1} parent=1 // pred_check
      _
    $region11: #{block_forward.1} parent=1 // pred_check_branch
      %24 = sbr.rel (0) target = $region13
    $region12: #{block_forward.1} parent=1 // pred_region
      _
    $region13: #{block_forward.1} parent=1 // pred_fallthru
      _
    // Predicated region
    $region14: #{block_forward.1} parent=1 // pred_check
      _
    $region15: #{block_forward.1} parent=1 // pred_check_branch
      %26 = sbr.rel (0) target = $region17
    $region16: #{block_forward.1} parent=1 // pred_region
      _
    $region17: #{block_forward.1} parent=1 // pred_fallthru
      _
    // Predicated region
    $region18: #{block_forward.1} parent=1 // pred_check
      _
    $region19: #{block_forward.1} parent=1 // pred_check_branch
      %28 = sbr.rel (0) target = $region21
    $region20: #{block_forward.1} parent=1 // pred_region
      _
    $region21: #{block_forward.1} parent=1 // pred_fallthru
      _
    // Predicated region
    $region22: #{block_forward.1} parent=1 // pred_check
      _
    $region23: #{block_forward.1} parent=1 // pred_check_branch
      %30 = sbr.rel (0) target = $region25
    $region24: #{block_forward.1} parent=1 // pred_region
      _
    $region25: #{block_forward.1} parent=1 // pred_fallthru
      _
    // Predicated region
    $region26: #{block_forward.1} parent=1 // pred_check
      _
    $region27: #{block_forward.1} parent=1 // pred_check_branch
      %32 = sbr.rel (0) target = $region29
    $region28: #{block_forward.1} parent=1 // pred_region
      _
    $region29: #{block_forward.1} parent=1 // pred_fallthru
      _
    // Predicated region
    $region30: #{block_forward.1} parent=1 // pred_check
      _
    $region31: #{block_forward.1} parent=1 // pred_check_branch
      %34 = sbr.rel (0) target = $region33
    $region32: #{block_forward.1} parent=1 // pred_region
      _
    $region33: #{block_forward.1} parent=1 // pred_fallthru
      _
    // Predicated region
    $region34: #{block_forward.1} parent=1 // pred_check
      _
    $region35: #{block_forward.1} parent=1 // pred_check_branch
      %36 = sbr.rel (0) target = $region37
    $region36: #{block_forward.1} parent=1 // pred_region
      _
    $region37: #{block_forward.1} parent=1 // pred_fallthru
      _
    // Predicated region
    $region38: #{block_forward.1} parent=1 // pred_check
      _
    $region39: #{block_forward.1} parent=1 // pred_check_branch
      %38 = sbr.rel (0) target = $region41
    $region40: #{block_forward.1} parent=1 // pred_region
      _
    $region41: #{block_forward.1} parent=1 // pred_fallthru
      _
    %v39 = vld [vmem:[%s0] sm:$0xff]
    %v40 = vld [vmem:[%s0 + $0x8] sm:$0xff]
    %v41 = vld [vmem:[%s7] sm:$0x3f]
    %v42 = vld [vmem:[%s3] sm:$0xff]
    %v43 = vld [vmem:[%s3 + $0x8] sm:$0xff]
    %v44 = vld [vmem:[%s3 + $0x10] sm:$0xff]
    %v45 = vld [vmem:[%s3 + $0x18] sm:$0xff]
    %vm46 = vcmask 261120
    %v47 = vsel %vm46, %v39, 0.0
    %48 = vadd.xlane.f32.xlu0 %v47
    %v49 = vpop.xlane.xlu0 %48
    %v50 = vsel %vm46, %v40, 0.0
    %51 = vadd.xlane.f32.xlu0 %v50
    %v52 = vpop.xlane.xlu0 %51
    %v53 = vrcp.pop 32.0
    %v54 = vmul.f32 32.0, %v53
    %v55 = vsub.f32 1.0, %v54
    %v56 = vmul.f32 %v53, %v55
    %v57 = vadd.f32 %v53, %v56
    %vm58 = vweird.f32 %v53
    %v59 = vsel %vm58, %v53, %v57
    %v60 = vmul.f32 %v49, %v59
    %v61 = vmul.f32 %v52, %v59
    %v62 = vsub.f32 %v39, %v60
    %v63 = vsub.f32 %v40, %v61
    %v64 = vmul.f32 %v62, %v62
    %v65 = vmul.f32 %v63, %v63
    %v66 = vsel %vm46, %v64, 0.0
    %67 = vadd.xlane.f32.xlu0 %v66
    %v68 = vpop.xlane.xlu0 %67
    %v69 = vsel %vm46, %v65, 0.0
    %70 = vadd.xlane.f32.xlu0 %v69
    %v71 = vpop.xlane.xlu0 %70
    %v72 = vmul.f32 %v68, %v59
    %v73 = vmul.f32 %v71, %v59
    %v74 = vadd.f32 %v72, 1e-06
    %v75 = vadd.f32 %v73, 1e-06
    %v76 = vrsqrt.pop %v74
    %v77 = vmul.f32 %v76, %v74
    %v78 = vmul.f32 %v77, %v76
    %v79 = vmul.f32 0.5, %v78
    %v80 = vsub.f32 1.5, %v79
    %v81 = vmul.f32 %v76, %v80
    %vm82 = vweird.f32 %v74
    %vm83 = vweird.f32 %v76
    %vm84 = vmor %vm82, %vm83
    %v85 = vsel %vm84, %v76, %v81
    %v86 = vrsqrt.pop %v75
    %v87 = vmul.f32 %v86, %v75
    %v88 = vmul.f32 %v87, %v86
    %v89 = vmul.f32 0.5, %v88
    %v90 = vsub.f32 1.5, %v89
    %v91 = vmul.f32 %v86, %v90
    %vm92 = vweird.f32 %v75
    %vm93 = vweird.f32 %v86
    %vm94 = vmor %vm92, %vm93
    %v95 = vsel %vm94, %v86, %v91
    %v96 = vmul.f32 %v62, %v85
    %v97 = vmul.f32 %v63, %v95
    %v98 = vperm.slane %v41, 0
    %v99 = vmul.f32 %v96, %v98
    %v100 = vmul.f32 %v97, %v98
    %v101 = vperm.slane %v41, 1
    %v102 = vadd.f32 %v99, %v101
    %v103 = vadd.f32 %v100, %v101
    %v104 = vld [vmem:[%s1] sm:$0xff]
    %v105 = vld [vmem:[%s1 + $0x8] sm:$0xff]
    %v106 = vld [vmem:[%s1 + $0x10] sm:$0xff]
    %v107 = vld [vmem:[%s1 + $0x18] sm:$0xff]
    %v108 = vld [vmem:[%s2] sm:$0x1]
    %v110 = vperm.slane %v108, 0
    %v113 = vsel %vm46, %v102, 0
    %v116 = vsel %vm46, %v103, 0
    %118 = vmatpush.msra.mxu0 0.0
    %119 = vmatpush.msra.mxu0 0.0
    %120 = vmatpush.msra.mxu0 0.0
    %121 = vmatpush.msra.mxu0 0.0
    %122 = vmatpush.msra.mxu0 0.0
    %123 = vmatpush.msra.mxu0 0.0
    %124 = vmatpush.msra.mxu0 0.0
    %125 = vmatpush.msra.mxu0 0.0
    %126 = vmatpush.msra.mxu0 0.0
    %127 = vmatpush.msra.mxu0 0.0
    %128 = vmatpush.msra.mxu0 0.0
    %129 = vmatpush.msra.mxu0 0.0
    %130 = vmatpush.msra.mxu0 %v107
    %131 = vmatpush.msra.mxu0 %v106
    %132 = vmatpush.msra.mxu0 %v105
    %133 = vmatpush.msra.mxu0 %v104
    %134 = vmatmul.f32.gmra.mxu0 %v113
    %v135 = vpop.f32.mrf.mxu0
    %v136 = vadd.f32 %v110, %v135
    %137 = vmatmul.f32.gmra.mxu0 %v116
    %v138 = vpop.f32.mrf.mxu0
    %v139 = vadd.f32 %v110, %v138
    %140 = vdwg.mxu0
    %v141 = vld [vmem:[%s9] sm:$0xff]
    %v142 = vld [vmem:[%s9 + $0x8] sm:$0xff]
    %v143 = vld [vmem:[%s9 + $0x10] sm:$0xff]
    %v144 = vld [vmem:[%s9 + $0x18] sm:$0xff]
    %v145 = vld [vmem:[%s9 + $0x20] sm:$0xff]
    %v146 = vld [vmem:[%s9 + $0x28] sm:$0xff]
    %v147 = vld [vmem:[%s9 + $0x30] sm:$0xff]
    %v148 = vld [vmem:[%s9 + $0x38] sm:$0xff]
    %vm149 = vcmask 523264
    %v151 = vsel %vm149, %v136, 0
    %v154 = vsel %vm149, %v139, 0
    %156 = vmatpush.msra.mxu0 0.0
    %157 = vmatpush.msra.mxu0 0.0
    %158 = vmatpush.msra.mxu0 0.0
    %159 = vmatpush.msra.mxu0 0.0
    %160 = vmatpush.msra.mxu0 0.0
    %161 = vmatpush.msra.mxu0 0.0
    %162 = vmatpush.msra.mxu0 0.0
    %163 = vmatpush.msra.mxu0 0.0
    %164 = vmatpush.msra.mxu0 %v148
    %165 = vmatpush.msra.mxu0 %v147
    %166 = vmatpush.msra.mxu0 %v146
    %167 = vmatpush.msra.mxu0 %v145
    %168 = vmatpush.msra.mxu0 %v144
    %169 = vmatpush.msra.mxu0 %v143
    %170 = vmatpush.msra.mxu0 %v142
    %171 = vmatpush.msra.mxu0 %v141
    %172 = vmatmul.f32.gmra.mxu0 %v151
    %v173 = vpop.f32.mrf.mxu0
    %v174 = vadd.f32 0.0, %v173
    %175 = vmatmul.f32.gmra.mxu0 %v154
    %v176 = vpop.f32.mrf.mxu0
    %v177 = vadd.f32 0.0, %v176
    %178 = vdwg.mxu0
    %v179 = vsub.f32 %v136, %v174
    %v180 = vsub.f32 %v139, %v177
    %v181 = vmul.f32 %v179, %v179
    %v182 = vmul.f32 %v180, %v180
    %v184 = vsel %vm149, %v181, 0
    %v187 = vsel %vm149, %v182, 0
    %189 = vmatpush.msra.mxu0 0.0
    %190 = vmatpush.msra.mxu0 0.0
    %191 = vmatpush.msra.mxu0 0.0
    %192 = vmatpush.msra.mxu0 0.0
    %193 = vmatpush.msra.mxu0 0.0
    %194 = vmatpush.msra.mxu0 0.0
    %195 = vmatpush.msra.mxu0 0.0
    %196 = vmatpush.msra.mxu0 0.0
    %197 = vmatpush.msra.mxu0 %v148
    %198 = vmatpush.msra.mxu0 %v147
    %199 = vmatpush.msra.mxu0 %v146
    %200 = vmatpush.msra.mxu0 %v145
    %201 = vmatpush.msra.mxu0 %v144
    %202 = vmatpush.msra.mxu0 %v143
    %203 = vmatpush.msra.mxu0 %v142
    %204 = vmatpush.msra.mxu0 %v141
    %205 = vmatmul.f32.gmra.mxu0 %v184
    %v206 = vpop.f32.mrf.mxu0
    %v207 = vadd.f32 1e-05, %v206
    %208 = vmatmul.f32.gmra.mxu0 %v187
    %v209 = vpop.f32.mrf.mxu0
    %v210 = vadd.f32 1e-05, %v209
    %211 = vdwg.mxu0
    %v212 = vrsqrt.pop %v207
    %v213 = vmul.f32 %v212, %v207
    %v214 = vmul.f32 %v213, %v212
    %v215 = vmul.f32 0.5, %v214
    %v216 = vsub.f32 1.5, %v215
    %v217 = vmul.f32 %v212, %v216
    %vm218 = vweird.f32 %v207
    %vm219 = vweird.f32 %v212
    %vm220 = vmor %vm218, %vm219
    %v221 = vsel %vm220, %v212, %v217
    %v222 = vrsqrt.pop %v210
    %v223 = vmul.f32 %v222, %v210
    %v224 = vmul.f32 %v223, %v222
    %v225 = vmul.f32 0.5, %v224
    %v226 = vsub.f32 1.5, %v225
    %v227 = vmul.f32 %v222, %v226
    %vm228 = vweird.f32 %v210
    %vm229 = vweird.f32 %v222
    %vm230 = vmor %vm228, %vm229
    %v231 = vsel %vm230, %v222, %v227
    %v232 = vmul.f32 %v179, %v221
    %v233 = vmul.f32 %v180, %v231
    %v234 = vld [vmem:[%s8] sm:$0x1]
    %v235 = vperm.slane %v234, 0
    %v236 = vmul.f32 %v232, %v235
    %v237 = vmul.f32 %v233, %v235
    %v238 = vld [vmem:[%s8 + $0x1] sm:$0x1]
    %v239 = vperm.slane %v238, 0
    %v240 = vadd.f32 %v236, %v239
    %v241 = vadd.f32 %v237, %v239
    %243 = vrot.lane.b32.xlu0 %v240, 96
    %v244 = vpop.permute.xlu0 %243
    %vm245 = vcmask 64512
    %v246 = vsel %vm245, %v240, 0
    %v248 = vsel %vm245, %v244, 0
    %250 = vmatpush.xpose.msra.mxu0 0.0
    %251 = vmatpush.xpose.msra.mxu0 0.0
    %252 = vmatpush.xpose.msra.mxu0 0.0
    %253 = vmatpush.xpose.msra.mxu0 0.0
    %254 = vmatpush.xpose.msra.mxu0 0.0
    %255 = vmatpush.xpose.msra.mxu0 0.0
    %256 = vmatpush.xpose.msra.mxu0 0.0
    %257 = vmatpush.xpose.msra.mxu0 0.0
    %258 = vmatpush.xpose.msra.mxu0 0.0
    %259 = vmatpush.xpose.msra.mxu0 0.0
    %260 = vmatpush.xpose.msra.mxu0 0.0
    %261 = vmatpush.xpose.msra.mxu0 0.0
    %262 = vmatpush.xpose.msra.mxu0 0.0
    %263 = vmatpush.xpose.msra.mxu0 0.0
    %264 = vmatpush.xpose.msra.mxu0 0.0
    %265 = vmatpush.xpose.msra.mxu0 %v248
    %266 = vmatmul.f32.gmra.mxu0 %v246
    %v267 = vpop.f32.mrf.mxu0
    %v268 = vadd.f32 0.0, %v267
    %269 = vdwg.mxu0
    %v270 = vsel %vm245, %v268, -inf
    %271 = vmax.xlane.f32.xlu0 %v270
    %v272 = vpop.xlane.xlu0 %271
    %v273 = vsub.f32 %v268, %v272
    %v274 = vmul.f32 %v273, 1.442695
    %v275 = vpow.pop %v274
    %v276 = vsel %vm245, %v275, 0.0
    %277 = vadd.xlane.f32.xlu0 %v276
    %v278 = vpop.xlane.xlu0 %277
    %v279 = vrcp.pop %v278
    %v280 = vmul.f32 %v278, %v279
    %v281 = vsub.f32 1.0, %v280
    %v282 = vmul.f32 %v279, %v281
    %v283 = vadd.f32 %v279, %v282
    %vm284 = vweird.f32 %v278
    %vm285 = vweird.f32 %v279
    %vm286 = vmor %vm284, %vm285
    %v287 = vsel %vm286, %v279, %v283
    %v288 = vand.u32 2147483647, %v278
    %vm289 = vcmp.eq.f32.partialorder %v288, 8.507059e+37
    %v290 = vand.u32 %v278, 2147483648
    %v291 = vor.u32 1.1754944e-38, %v290
    %v292 = vsel %vm289, %v291, %v287
    %v293 = vmul.f32 %v275, %v292
    %294 = vst.msk [vmem:[#allocation4] sm:$0xff] %vm245, %v293
    %295 = vrot.lane.b32.xlu0 %v136, 64
    %v296 = vpop.permute.xlu0 %295
    %v299 = vsel %vm245, %v293, 0
    %301 = vmatpush.msra.mxu0 0.0
    %302 = vmatpush.msra.mxu0 0.0
    %303 = vmatpush.msra.mxu0 0.0
    %304 = vmatpush.msra.mxu0 0.0
    %305 = vmatpush.msra.mxu0 0.0
    %306 = vmatpush.msra.mxu0 0.0
    %307 = vmatpush.msra.mxu0 0.0
    %308 = vmatpush.msra.mxu0 0.0
    %309 = vmatpush.msra.mxu0 0.0
    %310 = vmatpush.msra.mxu0 0.0
    %311 = vmatpush.msra.mxu0 0.0
    %312 = vmatpush.msra.mxu0 0.0
    %313 = vmatpush.msra.mxu0 0.0
    %314 = vmatpush.msra.mxu0 0.0
    %315 = vmatpush.msra.mxu0 0.0
    %316 = vmatpush.msra.mxu0 %v296
    %317 = vmatmul.f32.gmra.mxu0 %v299
    %v318 = vpop.f32.mrf.mxu0
    %v319 = vadd.f32 0.0, %v318
    %320 = vdwg.mxu0
    %321 = vrot.lane.b32.xlu0 %v240, 120
    %v322 = vpop.permute.xlu0 %321
    %323 = vrot.lane.b32.xlu0 %v240, 88
    %v324 = vpop.permute.xlu0 %323
    %v325 = vsel %vm245, %v322, 0
    %v327 = vsel %vm245, %v324, 0
    %329 = vmatpush.xpose.msra.mxu0 0.0
    %330 = vmatpush.xpose.msra.mxu0 0.0
    %331 = vmatpush.xpose.msra.mxu0 0.0
    %332 = vmatpush.xpose.msra.mxu0 0.0
    %333 = vmatpush.xpose.msra.mxu0 0.0
    %334 = vmatpush.xpose.msra.mxu0 0.0
    %335 = vmatpush.xpose.msra.mxu0 0.0
    %336 = vmatpush.xpose.msra.mxu0 0.0
    %337 = vmatpush.xpose.msra.mxu0 0.0
    %338 = vmatpush.xpose.msra.mxu0 0.0
    %339 = vmatpush.xpose.msra.mxu0 0.0
    %340 = vmatpush.xpose.msra.mxu0 0.0
    %341 = vmatpush.xpose.msra.mxu0 0.0
    %342 = vmatpush.xpose.msra.mxu0 0.0
    %343 = vmatpush.xpose.msra.mxu0 0.0
    %344 = vmatpush.xpose.msra.mxu0 %v327
    %345 = vmatmul.f32.gmra.mxu0 %v325
    %v346 = vpop.f32.mrf.mxu0
    %v347 = vadd.f32 0.0, %v346
    %348 = vdwg.mxu0
    %v349 = vsel %vm245, %v347, -inf
    %350 = vmax.xlane.f32.xlu0 %v349
    %v351 = vpop.xlane.xlu0 %350
    %v352 = vsub.f32 %v347, %v351
    %v353 = vmul.f32 %v352, 1.442695
    %v354 = vpow.pop %v353
    %v355 = vsel %vm245, %v354, 0.0
    %356 = vadd.xlane.f32.xlu0 %v355
    %v357 = vpop.xlane.xlu0 %356
    %v358 = vrcp.pop %v357
    %v359 = vmul.f32 %v357, %v358
    %v360 = vsub.f32 1.0, %v359
    %v361 = vmul.f32 %v358, %v360
    %v362 = vadd.f32 %v358, %v361
    %vm363 = vweird.f32 %v357
    %vm364 = vweird.f32 %v358
    %vm365 = vmor %vm363, %vm364
    %v366 = vsel %vm365, %v358, %v362
    %v367 = vand.u32 2147483647, %v357
    %vm368 = vcmp.eq.f32.partialorder %v367, 8.507059e+37
    %v369 = vand.u32 %v357, 2147483648
    %v370 = vor.u32 1.1754944e-38, %v369
    %v371 = vsel %vm368, %v370, %v366
    %v372 = vmul.f32 %v354, %v371
    %s373 = scalar_lea.vmem [#allocation4], 8
    %374 = vst.msk [vmem:[%s373] sm:$0xff] %vm245, %v372
    %375 = vrot.lane.b32.xlu0 %v136, 56
    %v376 = vpop.permute.xlu0 %375
    %v379 = vsel %vm245, %v372, 0
    %381 = vmatpush.msra.mxu0 0.0
    %382 = vmatpush.msra.mxu0 0.0
    %383 = vmatpush.msra.mxu0 0.0
    %384 = vmatpush.msra.mxu0 0.0
    %385 = vmatpush.msra.mxu0 0.0
    %386 = vmatpush.msra.mxu0 0.0
    %387 = vmatpush.msra.mxu0 0.0
    %388 = vmatpush.msra.mxu0 0.0
    %389 = vmatpush.msra.mxu0 0.0
    %390 = vmatpush.msra.mxu0 0.0
    %391 = vmatpush.msra.mxu0 0.0
    %392 = vmatpush.msra.mxu0 0.0
    %393 = vmatpush.msra.mxu0 0.0
    %394 = vmatpush.msra.mxu0 0.0
    %395 = vmatpush.msra.mxu0 0.0
    %396 = vmatpush.msra.mxu0 %v376
    %397 = vmatmul.f32.gmra.mxu0 %v379
    %v398 = vpop.f32.mrf.mxu0
    %v399 = vadd.f32 0.0, %v398
    %400 = vdwg.mxu0
    %v402 = vsel %vm245, %v399, 0
    %404 = vmatpush.msra.mxu0 0.0
    %405 = vmatpush.msra.mxu0 0.0
    %406 = vmatpush.msra.mxu0 0.0
    %407 = vmatpush.msra.mxu0 0.0
    %408 = vmatpush.msra.mxu0 0.0
    %409 = vmatpush.msra.mxu0 0.0
    %410 = vmatpush.msra.mxu0 0.0
    %411 = vmatpush.msra.mxu0 0.0
    %412 = vmatpush.msra.mxu0 0.0
    %413 = vmatpush.msra.mxu0 0.0
    %414 = vmatpush.msra.mxu0 0.0
    %415 = vmatpush.msra.mxu0 0.0
    %416 = vmatpush.msra.mxu0 0.0
    %417 = vmatpush.msra.mxu0 0.0
    %418 = vmatpush.msra.mxu0 0.0
    %419 = vmatpush.msra.mxu0 %v43
    %420 = vmatmul.f32.gmra.mxu0 %v402
    %v421 = vpop.f32.mrf.mxu0
    %v422 = vadd.f32 0.0, %v421
    %423 = vdwg.mxu0
    %v425 = vsel %vm245, %v319, 0
    %427 = vmatpush.msra.mxu0 0.0
    %428 = vmatpush.msra.mxu0 0.0
    %429 = vmatpush.msra.mxu0 0.0
    %430 = vmatpush.msra.mxu0 0.0
    %431 = vmatpush.msra.mxu0 0.0
    %432 = vmatpush.msra.mxu0 0.0
    %433 = vmatpush.msra.mxu0 0.0
    %434 = vmatpush.msra.mxu0 0.0
    %435 = vmatpush.msra.mxu0 0.0
    %436 = vmatpush.msra.mxu0 0.0
    %437 = vmatpush.msra.mxu0 0.0
    %438 = vmatpush.msra.mxu0 0.0
    %439 = vmatpush.msra.mxu0 0.0
    %440 = vmatpush.msra.mxu0 0.0
    %441 = vmatpush.msra.mxu0 0.0
    %442 = vmatpush.msra.mxu0 %v42
    %443 = vmatmul.f32.gmra.mxu0 %v425
    %v444 = vpop.f32.mrf.mxu0
    %v445 = vadd.f32 %v422, %v444
    %446 = vdwg.mxu0
    %447 = vrot.lane.b32.xlu0 %v240, 112
    %v448 = vpop.permute.xlu0 %447
    %449 = vrot.lane.b32.xlu0 %v240, 80
    %v450 = vpop.permute.xlu0 %449
    %v451 = vsel %vm245, %v448, 0
    %v453 = vsel %vm245, %v450, 0
    %455 = vmatpush.xpose.msra.mxu0 0.0
    %456 = vmatpush.xpose.msra.mxu0 0.0
    %457 = vmatpush.xpose.msra.mxu0 0.0
    %458 = vmatpush.xpose.msra.mxu0 0.0
    %459 = vmatpush.xpose.msra.mxu0 0.0
    %460 = vmatpush.xpose.msra.mxu0 0.0
    %461 = vmatpush.xpose.msra.mxu0 0.0
    %462 = vmatpush.xpose.msra.mxu0 0.0
    %463 = vmatpush.xpose.msra.mxu0 0.0
    %464 = vmatpush.xpose.msra.mxu0 0.0
    %465 = vmatpush.xpose.msra.mxu0 0.0
    %466 = vmatpush.xpose.msra.mxu0 0.0
    %467 = vmatpush.xpose.msra.mxu0 0.0
    %468 = vmatpush.xpose.msra.mxu0 0.0
    %469 = vmatpush.xpose.msra.mxu0 0.0
    %470 = vmatpush.xpose.msra.mxu0 %v453
    %471 = vmatmul.f32.gmra.mxu0 %v451
    %v472 = vpop.f32.mrf.mxu0
    %v473 = vadd.f32 0.0, %v472
    %474 = vdwg.mxu0
    %v475 = vsel %vm245, %v473, -inf
    %476 = vmax.xlane.f32.xlu0 %v475
    %v477 = vpop.xlane.xlu0 %476
    %v478 = vsub.f32 %v473, %v477
    %v479 = vmul.f32 %v478, 1.442695
    %v480 = vpow.pop %v479
    %v481 = vsel %vm245, %v480, 0.0
    %482 = vadd.xlane.f32.xlu0 %v481
    %v483 = vpop.xlane.xlu0 %482
    %v484 = vrcp.pop %v483
    %v485 = vmul.f32 %v483, %v484
    %v486 = vsub.f32 1.0, %v485
    %v487 = vmul.f32 %v484, %v486
    %v488 = vadd.f32 %v484, %v487
    %vm489 = vweird.f32 %v483
    %vm490 = vweird.f32 %v484
    %vm491 = vmor %vm489, %vm490
    %v492 = vsel %vm491, %v484, %v488
    %v493 = vand.u32 2147483647, %v483
    %vm494 = vcmp.eq.f32.partialorder %v493, 8.507059e+37
    %v495 = vand.u32 %v483, 2147483648
    %v496 = vor.u32 1.1754944e-38, %v495
    %v497 = vsel %vm494, %v496, %v492
    %v498 = vmul.f32 %v480, %v497
    %s499 = scalar_lea.vmem [#allocation4], 16
    %500 = vst.msk [vmem:[%s499] sm:$0xff] %vm245, %v498
    %501 = vrot.lane.b32.xlu0 %v136, 48
    %v502 = vpop.permute.xlu0 %501
    %v505 = vsel %vm245, %v498, 0
    %507 = vmatpush.msra.mxu0 0.0
    %508 = vmatpush.msra.mxu0 0.0
    %509 = vmatpush.msra.mxu0 0.0
    %510 = vmatpush.msra.mxu0 0.0
    %511 = vmatpush.msra.mxu0 0.0
    %512 = vmatpush.msra.mxu0 0.0
    %513 = vmatpush.msra.mxu0 0.0
    %514 = vmatpush.msra.mxu0 0.0
    %515 = vmatpush.msra.mxu0 0.0
    %516 = vmatpush.msra.mxu0 0.0
    %517 = vmatpush.msra.mxu0 0.0
    %518 = vmatpush.msra.mxu0 0.0
    %519 = vmatpush.msra.mxu0 0.0
    %520 = vmatpush.msra.mxu0 0.0
    %521 = vmatpush.msra.mxu0 0.0
    %522 = vmatpush.msra.mxu0 %v502
    %523 = vmatmul.f32.gmra.mxu0 %v505
    %v524 = vpop.f32.mrf.mxu0
    %v525 = vadd.f32 0.0, %v524
    %526 = vdwg.mxu0
    %v528 = vsel %vm245, %v525, 0
    %530 = vmatpush.msra.mxu0 0.0
    %531 = vmatpush.msra.mxu0 0.0
    %532 = vmatpush.msra.mxu0 0.0
    %533 = vmatpush.msra.mxu0 0.0
    %534 = vmatpush.msra.mxu0 0.0
    %535 = vmatpush.msra.mxu0 0.0
    %536 = vmatpush.msra.mxu0 0.0
    %537 = vmatpush.msra.mxu0 0.0
    %538 = vmatpush.msra.mxu0 0.0
    %539 = vmatpush.msra.mxu0 0.0
    %540 = vmatpush.msra.mxu0 0.0
    %541 = vmatpush.msra.mxu0 0.0
    %542 = vmatpush.msra.mxu0 0.0
    %543 = vmatpush.msra.mxu0 0.0
    %544 = vmatpush.msra.mxu0 0.0
    %545 = vmatpush.msra.mxu0 %v44
    %546 = vmatmul.f32.gmra.mxu0 %v528
    %v547 = vpop.f32.mrf.mxu0
    %v548 = vadd.f32 0.0, %v547
    %549 = vdwg.mxu0
    %v550 = vadd.f32 %v445, %v548
    %551 = vrot.lane.b32.xlu0 %v240, 104
    %v552 = vpop.permute.xlu0 %551
    %553 = vrot.lane.b32.xlu0 %v240, 72
    %v554 = vpop.permute.xlu0 %553
    %v555 = vsel %vm245, %v552, 0
    %v557 = vsel %vm245, %v554, 0
    %559 = vmatpush.xpose.msra.mxu0 0.0
    %560 = vmatpush.xpose.msra.mxu0 0.0
    %561 = vmatpush.xpose.msra.mxu0 0.0
    %562 = vmatpush.xpose.msra.mxu0 0.0
    %563 = vmatpush.xpose.msra.mxu0 0.0
    %564 = vmatpush.xpose.msra.mxu0 0.0
    %565 = vmatpush.xpose.msra.mxu0 0.0
    %566 = vmatpush.xpose.msra.mxu0 0.0
    %567 = vmatpush.xpose.msra.mxu0 0.0
    %568 = vmatpush.xpose.msra.mxu0 0.0
    %569 = vmatpush.xpose.msra.mxu0 0.0
    %570 = vmatpush.xpose.msra.mxu0 0.0
    %571 = vmatpush.xpose.msra.mxu0 0.0
    %572 = vmatpush.xpose.msra.mxu0 0.0
    %573 = vmatpush.xpose.msra.mxu0 0.0
    %574 = vmatpush.xpose.msra.mxu0 %v557
    %575 = vmatmul.f32.gmra.mxu0 %v555
    %v576 = vpop.f32.mrf.mxu0
    %v577 = vadd.f32 0.0, %v576
    %578 = vdwg.mxu0
    %v579 = vsel %vm245, %v577, -inf
    %580 = vmax.xlane.f32.xlu0 %v579
    %v581 = vpop.xlane.xlu0 %580
    %v582 = vsub.f32 %v577, %v581
    %v583 = vmul.f32 %v582, 1.442695
    %v584 = vpow.pop %v583
    %v585 = vsel %vm245, %v584, 0.0
    %586 = vadd.xlane.f32.xlu0 %v585
    %v587 = vpop.xlane.xlu0 %586
    %v588 = vrcp.pop %v587
    %v589 = vmul.f32 %v587, %v588
    %v590 = vsub.f32 1.0, %v589
    %v591 = vmul.f32 %v588, %v590
    %v592 = vadd.f32 %v588, %v591
    %vm593 = vweird.f32 %v587
    %vm594 = vweird.f32 %v588
    %vm595 = vmor %vm593, %vm594
    %v596 = vsel %vm595, %v588, %v592
    %v597 = vand.u32 2147483647, %v587
    %vm598 = vcmp.eq.f32.partialorder %v597, 8.507059e+37
    %v599 = vand.u32 %v587, 2147483648
    %v600 = vor.u32 1.1754944e-38, %v599
    %v601 = vsel %vm598, %v600, %v596
    %v602 = vmul.f32 %v584, %v601
    %s603 = scalar_lea.vmem [#allocation4], 24
    %604 = vst.msk [vmem:[%s603] sm:$0xff] %vm245, %v602
    %605 = vrot.lane.b32.xlu0 %v136, 40
    %v606 = vpop.permute.xlu0 %605
    %v609 = vsel %vm245, %v602, 0
    %611 = vmatpush.msra.mxu0 0.0
    %612 = vmatpush.msra.mxu0 0.0
    %613 = vmatpush.msra.mxu0 0.0
    %614 = vmatpush.msra.mxu0 0.0
    %615 = vmatpush.msra.mxu0 0.0
    %616 = vmatpush.msra.mxu0 0.0
    %617 = vmatpush.msra.mxu0 0.0
    %618 = vmatpush.msra.mxu0 0.0
    %619 = vmatpush.msra.mxu0 0.0
    %620 = vmatpush.msra.mxu0 0.0
    %621 = vmatpush.msra.mxu0 0.0
    %622 = vmatpush.msra.mxu0 0.0
    %623 = vmatpush.msra.mxu0 0.0
    %624 = vmatpush.msra.mxu0 0.0
    %625 = vmatpush.msra.mxu0 0.0
    %626 = vmatpush.msra.mxu0 %v606
    %627 = vmatmul.f32.gmra.mxu0 %v609
    %v628 = vpop.f32.mrf.mxu0
    %v629 = vadd.f32 0.0, %v628
    %630 = vdwg.mxu0
    %v632 = vsel %vm245, %v629, 0
    %634 = vmatpush.msra.mxu0 0.0
    %635 = vmatpush.msra.mxu0 0.0
    %636 = vmatpush.msra.mxu0 0.0
    %637 = vmatpush.msra.mxu0 0.0
    %638 = vmatpush.msra.mxu0 0.0
    %639 = vmatpush.msra.mxu0 0.0
    %640 = vmatpush.msra.mxu0 0.0
    %641 = vmatpush.msra.mxu0 0.0
    %642 = vmatpush.msra.mxu0 0.0
    %643 = vmatpush.msra.mxu0 0.0
    %644 = vmatpush.msra.mxu0 0.0
    %645 = vmatpush.msra.mxu0 0.0
    %646 = vmatpush.msra.mxu0 0.0
    %647 = vmatpush.msra.mxu0 0.0
    %648 = vmatpush.msra.mxu0 0.0
    %649 = vmatpush.msra.mxu0 %v45
    %650 = vmatmul.f32.gmra.mxu0 %v632
    %v651 = vpop.f32.mrf.mxu0
    %v652 = vadd.f32 0.0, %v651
    %653 = vdwg.mxu0
    %v654 = vadd.f32 %v550, %v652
    %v655 = vadd.f32 %v39, %v654
    %v656 = vperm.slane %v41, 4
    %v657 = vadd.f32 %v655, %v656
    %659 = vrot.lane.b32.xlu0 %v241, 96
    %v660 = vpop.permute.xlu0 %659
    %v661 = vsel %vm245, %v241, 0
    %v663 = vsel %vm245, %v660, 0
    %665 = vmatpush.xpose.msra.mxu0 0.0
    %666 = vmatpush.xpose.msra.mxu0 0.0
    %667 = vmatpush.xpose.msra.mxu0 0.0
    %668 = vmatpush.xpose.msra.mxu0 0.0
    %669 = vmatpush.xpose.msra.mxu0 0.0
    %670 = vmatpush.xpose.msra.mxu0 0.0
    %671 = vmatpush.xpose.msra.mxu0 0.0
    %672 = vmatpush.xpose.msra.mxu0 0.0
    %673 = vmatpush.xpose.msra.mxu0 0.0
    %674 = vmatpush.xpose.msra.mxu0 0.0
    %675 = vmatpush.xpose.msra.mxu0 0.0
    %676 = vmatpush.xpose.msra.mxu0 0.0
    %677 = vmatpush.xpose.msra.mxu0 0.0
    %678 = vmatpush.xpose.msra.mxu0 0.0
    %679 = vmatpush.xpose.msra.mxu0 0.0
    %680 = vmatpush.xpose.msra.mxu0 %v663
    %681 = vmatmul.f32.gmra.mxu0 %v661
    %v682 = vpop.f32.mrf.mxu0
    %v683 = vadd.f32 0.0, %v682
    %684 = vdwg.mxu0
    %v685 = vsel %vm245, %v683, -inf
    %686 = vmax.xlane.f32.xlu0 %v685
    %v687 = vpop.xlane.xlu0 %686
    %v688 = vsub.f32 %v683, %v687
    %v689 = vmul.f32 %v688, 1.442695
    %v690 = vpow.pop %v689
    %v691 = vsel %vm245, %v690, 0.0
    %692 = vadd.xlane.f32.xlu0 %v691
    %v693 = vpop.xlane.xlu0 %692
    %v694 = vrcp.pop %v693
    %v695 = vmul.f32 %v693, %v694
    %v696 = vsub.f32 1.0, %v695
    %v697 = vmul.f32 %v694, %v696
    %v698 = vadd.f32 %v694, %v697
    %vm699 = vweird.f32 %v693
    %vm700 = vweird.f32 %v694
    %vm701 = vmor %vm699, %vm700
    %v702 = vsel %vm701, %v694, %v698
    %v703 = vand.u32 2147483647, %v693
    %vm704 = vcmp.eq.f32.partialorder %v703, 8.507059e+37
    %v705 = vand.u32 %v693, 2147483648
    %v706 = vor.u32 1.1754944e-38, %v705
    %v707 = vsel %vm704, %v706, %v702
    %v708 = vmul.f32 %v690, %v707
    %s709 = scalar_lea.vmem [#allocation4], 32
    %710 = vst.msk [vmem:[%s709] sm:$0xff] %vm245, %v708
    %711 = vrot.lane.b32.xlu0 %v139, 64
    %v712 = vpop.permute.xlu0 %711
    %v715 = vsel %vm245, %v708, 0
    %717 = vmatpush.msra.mxu0 0.0
    %718 = vmatpush.msra.mxu0 0.0
    %719 = vmatpush.msra.mxu0 0.0
    %720 = vmatpush.msra.mxu0 0.0
    %721 = vmatpush.msra.mxu0 0.0
    %722 = vmatpush.msra.mxu0 0.0
    %723 = vmatpush.msra.mxu0 0.0
    %724 = vmatpush.msra.mxu0 0.0
    %725 = vmatpush.msra.mxu0 0.0
    %726 = vmatpush.msra.mxu0 0.0
    %727 = vmatpush.msra.mxu0 0.0
    %728 = vmatpush.msra.mxu0 0.0
    %729 = vmatpush.msra.mxu0 0.0
    %730 = vmatpush.msra.mxu0 0.0
    %731 = vmatpush.msra.mxu0 0.0
    %732 = vmatpush.msra.mxu0 %v712
    %733 = vmatmul.f32.gmra.mxu0 %v715
    %v734 = vpop.f32.mrf.mxu0
    %v735 = vadd.f32 0.0, %v734
    %736 = vdwg.mxu0
    %737 = vrot.lane.b32.xlu0 %v241, 120
    %v738 = vpop.permute.xlu0 %737
    %739 = vrot.lane.b32.xlu0 %v241, 88
    %v740 = vpop.permute.xlu0 %739
    %v741 = vsel %vm245, %v738, 0
    %v743 = vsel %vm245, %v740, 0
    %745 = vmatpush.xpose.msra.mxu0 0.0
    %746 = vmatpush.xpose.msra.mxu0 0.0
    %747 = vmatpush.xpose.msra.mxu0 0.0
    %748 = vmatpush.xpose.msra.mxu0 0.0
    %749 = vmatpush.xpose.msra.mxu0 0.0
    %750 = vmatpush.xpose.msra.mxu0 0.0
    %751 = vmatpush.xpose.msra.mxu0 0.0
    %752 = vmatpush.xpose.msra.mxu0 0.0
    %753 = vmatpush.xpose.msra.mxu0 0.0
    %754 = vmatpush.xpose.msra.mxu0 0.0
    %755 = vmatpush.xpose.msra.mxu0 0.0
    %756 = vmatpush.xpose.msra.mxu0 0.0
    %757 = vmatpush.xpose.msra.mxu0 0.0
    %758 = vmatpush.xpose.msra.mxu0 0.0
    %759 = vmatpush.xpose.msra.mxu0 0.0
    %760 = vmatpush.xpose.msra.mxu0 %v743
    %761 = vmatmul.f32.gmra.mxu0 %v741
    %v762 = vpop.f32.mrf.mxu0
    %v763 = vadd.f32 0.0, %v762
    %764 = vdwg.mxu0
    %v765 = vsel %vm245, %v763, -inf
    %766 = vmax.xlane.f32.xlu0 %v765
    %v767 = vpop.xlane.xlu0 %766
    %v768 = vsub.f32 %v763, %v767
    %v769 = vmul.f32 %v768, 1.442695
    %v770 = vpow.pop %v769
    %v771 = vsel %vm245, %v770, 0.0
    %772 = vadd.xlane.f32.xlu0 %v771
    %v773 = vpop.xlane.xlu0 %772
    %v774 = vrcp.pop %v773
    %v775 = vmul.f32 %v773, %v774
    %v776 = vsub.f32 1.0, %v775
    %v777 = vmul.f32 %v774, %v776
    %v778 = vadd.f32 %v774, %v777
    %vm779 = vweird.f32 %v773
    %vm780 = vweird.f32 %v774
    %vm781 = vmor %vm779, %vm780
    %v782 = vsel %vm781, %v774, %v778
    %v783 = vand.u32 2147483647, %v773
    %vm784 = vcmp.eq.f32.partialorder %v783, 8.507059e+37
    %v785 = vand.u32 %v773, 2147483648
    %v786 = vor.u32 1.1754944e-38, %v785
    %v787 = vsel %vm784, %v786, %v782
    %v788 = vmul.f32 %v770, %v787
    %s789 = scalar_lea.vmem [#allocation4], 40
    %790 = vst.msk [vmem:[%s789] sm:$0xff] %vm245, %v788
    %791 = vrot.lane.b32.xlu0 %v139, 56
    %v792 = vpop.permute.xlu0 %791
    %v795 = vsel %vm245, %v788, 0
    %797 = vmatpush.msra.mxu0 0.0
    %798 = vmatpush.msra.mxu0 0.0
    %799 = vmatpush.msra.mxu0 0.0
    %800 = vmatpush.msra.mxu0 0.0
    %801 = vmatpush.msra.mxu0 0.0
    %802 = vmatpush.msra.mxu0 0.0
    %803 = vmatpush.msra.mxu0 0.0
    %804 = vmatpush.msra.mxu0 0.0
    %805 = vmatpush.msra.mxu0 0.0
    %806 = vmatpush.msra.mxu0 0.0
    %807 = vmatpush.msra.mxu0 0.0
    %808 = vmatpush.msra.mxu0 0.0
    %809 = vmatpush.msra.mxu0 0.0
    %810 = vmatpush.msra.mxu0 0.0
    %811 = vmatpush.msra.mxu0 0.0
    %812 = vmatpush.msra.mxu0 %v792
    %813 = vmatmul.f32.gmra.mxu0 %v795
    %v814 = vpop.f32.mrf.mxu0
    %v815 = vadd.f32 0.0, %v814
    %816 = vdwg.mxu0
    %v818 = vsel %vm245, %v815, 0
    %820 = vmatpush.msra.mxu0 0.0
    %821 = vmatpush.msra.mxu0 0.0
    %822 = vmatpush.msra.mxu0 0.0
    %823 = vmatpush.msra.mxu0 0.0
    %824 = vmatpush.msra.mxu0 0.0
    %825 = vmatpush.msra.mxu0 0.0
    %826 = vmatpush.msra.mxu0 0.0
    %827 = vmatpush.msra.mxu0 0.0
    %828 = vmatpush.msra.mxu0 0.0
    %829 = vmatpush.msra.mxu0 0.0
    %830 = vmatpush.msra.mxu0 0.0
    %831 = vmatpush.msra.mxu0 0.0
    %832 = vmatpush.msra.mxu0 0.0
    %833 = vmatpush.msra.mxu0 0.0
    %834 = vmatpush.msra.mxu0 0.0
    %835 = vmatpush.msra.mxu0 %v43
    %836 = vmatmul.f32.gmra.mxu0 %v818
    %v837 = vpop.f32.mrf.mxu0
    %v838 = vadd.f32 0.0, %v837
    %839 = vdwg.mxu0
    %v841 = vsel %vm245, %v735, 0
    %843 = vmatpush.msra.mxu0 0.0
    %844 = vmatpush.msra.mxu0 0.0
    %845 = vmatpush.msra.mxu0 0.0
    %846 = vmatpush.msra.mxu0 0.0
    %847 = vmatpush.msra.mxu0 0.0
    %848 = vmatpush.msra.mxu0 0.0
    %849 = vmatpush.msra.mxu0 0.0
    %850 = vmatpush.msra.mxu0 0.0
    %851 = vmatpush.msra.mxu0 0.0
    %852 = vmatpush.msra.mxu0 0.0
    %853 = vmatpush.msra.mxu0 0.0
    %854 = vmatpush.msra.mxu0 0.0
    %855 = vmatpush.msra.mxu0 0.0
    %856 = vmatpush.msra.mxu0 0.0
    %857 = vmatpush.msra.mxu0 0.0
    %858 = vmatpush.msra.mxu0 %v42
    %859 = vmatmul.f32.gmra.mxu0 %v841
    %v860 = vpop.f32.mrf.mxu0
    %v861 = vadd.f32 %v838, %v860
    %862 = vdwg.mxu0
    %863 = vrot.lane.b32.xlu0 %v241, 112
    %v864 = vpop.permute.xlu0 %863
    %865 = vrot.lane.b32.xlu0 %v241, 80
    %v866 = vpop.permute.xlu0 %865
    %v867 = vsel %vm245, %v864, 0
    %v869 = vsel %vm245, %v866, 0
    %871 = vmatpush.xpose.msra.mxu0 0.0
    %872 = vmatpush.xpose.msra.mxu0 0.0
    %873 = vmatpush.xpose.msra.mxu0 0.0
    %874 = vmatpush.xpose.msra.mxu0 0.0
    %875 = vmatpush.xpose.msra.mxu0 0.0
    %876 = vmatpush.xpose.msra.mxu0 0.0
    %877 = vmatpush.xpose.msra.mxu0 0.0
    %878 = vmatpush.xpose.msra.mxu0 0.0
    %879 = vmatpush.xpose.msra.mxu0 0.0
    %880 = vmatpush.xpose.msra.mxu0 0.0
    %881 = vmatpush.xpose.msra.mxu0 0.0
    %882 = vmatpush.xpose.msra.mxu0 0.0
    %883 = vmatpush.xpose.msra.mxu0 0.0
    %884 = vmatpush.xpose.msra.mxu0 0.0
    %885 = vmatpush.xpose.msra.mxu0 0.0
    %886 = vmatpush.xpose.msra.mxu0 %v869
    %887 = vmatmul.f32.gmra.mxu0 %v867
    %v888 = vpop.f32.mrf.mxu0
    %v889 = vadd.f32 0.0, %v888
    %890 = vdwg.mxu0
    %v891 = vsel %vm245, %v889, -inf
    %892 = vmax.xlane.f32.xlu0 %v891
    %v893 = vpop.xlane.xlu0 %892
    %v894 = vsub.f32 %v889, %v893
    %v895 = vmul.f32 %v894, 1.442695
    %v896 = vpow.pop %v895
    %v897 = vsel %vm245, %v896, 0.0
    %898 = vadd.xlane.f32.xlu0 %v897
    %v899 = vpop.xlane.xlu0 %898
    %v900 = vrcp.pop %v899
    %v901 = vmul.f32 %v899, %v900
    %v902 = vsub.f32 1.0, %v901
    %v903 = vmul.f32 %v900, %v902
    %v904 = vadd.f32 %v900, %v903
    %vm905 = vweird.f32 %v899
    %vm906 = vweird.f32 %v900
    %vm907 = vmor %vm905, %vm906
    %v908 = vsel %vm907, %v900, %v904
    %v909 = vand.u32 2147483647, %v899
    %vm910 = vcmp.eq.f32.partialorder %v909, 8.507059e+37
    %v911 = vand.u32 %v899, 2147483648
    %v912 = vor.u32 1.1754944e-38, %v911
    %v913 = vsel %vm910, %v912, %v908
    %v914 = vmul.f32 %v896, %v913
    %s915 = scalar_lea.vmem [#allocation4], 48
    %916 = vst.msk [vmem:[%s915] sm:$0xff] %vm245, %v914
    %917 = vrot.lane.b32.xlu0 %v139, 48
    %v918 = vpop.permute.xlu0 %917
    %v921 = vsel %vm245, %v914, 0
    %923 = vmatpush.msra.mxu0 0.0
    %924 = vmatpush.msra.mxu0 0.0
    %925 = vmatpush.msra.mxu0 0.0
    %926 = vmatpush.msra.mxu0 0.0
    %927 = vmatpush.msra.mxu0 0.0
    %928 = vmatpush.msra.mxu0 0.0
    %929 = vmatpush.msra.mxu0 0.0
    %930 = vmatpush.msra.mxu0 0.0
    %931 = vmatpush.msra.mxu0 0.0
    %932 = vmatpush.msra.mxu0 0.0
    %933 = vmatpush.msra.mxu0 0.0
    %934 = vmatpush.msra.mxu0 0.0
    %935 = vmatpush.msra.mxu0 0.0
    %936 = vmatpush.msra.mxu0 0.0
    %937 = vmatpush.msra.mxu0 0.0
    %938 = vmatpush.msra.mxu0 %v918
    %939 = vmatmul.f32.gmra.mxu0 %v921
    %v940 = vpop.f32.mrf.mxu0
    %v941 = vadd.f32 0.0, %v940
    %942 = vdwg.mxu0
    %v944 = vsel %vm245, %v941, 0
    %946 = vmatpush.msra.mxu0 0.0
    %947 = vmatpush.msra.mxu0 0.0
    %948 = vmatpush.msra.mxu0 0.0
    %949 = vmatpush.msra.mxu0 0.0
    %950 = vmatpush.msra.mxu0 0.0
    %951 = vmatpush.msra.mxu0 0.0
    %952 = vmatpush.msra.mxu0 0.0
    %953 = vmatpush.msra.mxu0 0.0
    %954 = vmatpush.msra.mxu0 0.0
    %955 = vmatpush.msra.mxu0 0.0
    %956 = vmatpush.msra.mxu0 0.0
    %957 = vmatpush.msra.mxu0 0.0
    %958 = vmatpush.msra.mxu0 0.0
    %959 = vmatpush.msra.mxu0 0.0
    %960 = vmatpush.msra.mxu0 0.0
    %961 = vmatpush.msra.mxu0 %v44
    %962 = vmatmul.f32.gmra.mxu0 %v944
    %v963 = vpop.f32.mrf.mxu0
    %v964 = vadd.f32 0.0, %v963
    %965 = vdwg.mxu0
    %v966 = vadd.f32 %v861, %v964
    %967 = vrot.lane.b32.xlu0 %v241, 104
    %v968 = vpop.permute.xlu0 %967
    %969 = vrot.lane.b32.xlu0 %v241, 72
    %v970 = vpop.permute.xlu0 %969
    %v971 = vsel %vm245, %v968, 0
    %v973 = vsel %vm245, %v970, 0
    %975 = vmatpush.xpose.msra.mxu0 0.0
    %976 = vmatpush.xpose.msra.mxu0 0.0
    %977 = vmatpush.xpose.msra.mxu0 0.0
    %978 = vmatpush.xpose.msra.mxu0 0.0
    %979 = vmatpush.xpose.msra.mxu0 0.0
    %980 = vmatpush.xpose.msra.mxu0 0.0
    %981 = vmatpush.xpose.msra.mxu0 0.0
    %982 = vmatpush.xpose.msra.mxu0 0.0
    %983 = vmatpush.xpose.msra.mxu0 0.0
    %984 = vmatpush.xpose.msra.mxu0 0.0
    %985 = vmatpush.xpose.msra.mxu0 0.0
    %986 = vmatpush.xpose.msra.mxu0 0.0
    %987 = vmatpush.xpose.msra.mxu0 0.0
    %988 = vmatpush.xpose.msra.mxu0 0.0
    %989 = vmatpush.xpose.msra.mxu0 0.0
    %990 = vmatpush.xpose.msra.mxu0 %v973
    %991 = vmatmul.f32.gmra.mxu0 %v971
    %v992 = vpop.f32.mrf.mxu0
    %v993 = vadd.f32 0.0, %v992
    %994 = vdwg.mxu0
    %v995 = vsel %vm245, %v993, -inf
    %996 = vmax.xlane.f32.xlu0 %v995
    %v997 = vpop.xlane.xlu0 %996
    %v998 = vsub.f32 %v993, %v997
    %v999 = vmul.f32 %v998, 1.442695
    %v1000 = vpow.pop %v999
    %v1001 = vsel %vm245, %v1000, 0.0
    %1002 = vadd.xlane.f32.xlu0 %v1001
    %v1003 = vpop.xlane.xlu0 %1002
    %v1004 = vrcp.pop %v1003
    %v1005 = vmul.f32 %v1003, %v1004
    %v1006 = vsub.f32 1.0, %v1005
    %v1007 = vmul.f32 %v1004, %v1006
    %v1008 = vadd.f32 %v1004, %v1007
    %vm1009 = vweird.f32 %v1003
    %vm1010 = vweird.f32 %v1004
    %vm1011 = vmor %vm1009, %vm1010
    %v1012 = vsel %vm1011, %v1004, %v1008
    %v1013 = vand.u32 2147483647, %v1003
    %vm1014 = vcmp.eq.f32.partialorder %v1013, 8.507059e+37
    %v1015 = vand.u32 %v1003, 2147483648
    %v1016 = vor.u32 1.1754944e-38, %v1015
    %v1017 = vsel %vm1014, %v1016, %v1012
    %v1018 = vmul.f32 %v1000, %v1017
    %s1019 = scalar_lea.vmem [#allocation4], 56
    %1020 = vst.msk [vmem:[%s1019] sm:$0xff] %vm245, %v1018
    %1021 = vrot.lane.b32.xlu0 %v139, 40
    %v1022 = vpop.permute.xlu0 %1021
    %v1025 = vsel %vm245, %v1018, 0
    %1027 = vmatpush.msra.mxu0 0.0
    %1028 = vmatpush.msra.mxu0 0.0
    %1029 = vmatpush.msra.mxu0 0.0
    %1030 = vmatpush.msra.mxu0 0.0
    %1031 = vmatpush.msra.mxu0 0.0
    %1032 = vmatpush.msra.mxu0 0.0
    %1033 = vmatpush.msra.mxu0 0.0
    %1034 = vmatpush.msra.mxu0 0.0
    %1035 = vmatpush.msra.mxu0 0.0
    %1036 = vmatpush.msra.mxu0 0.0
    %1037 = vmatpush.msra.mxu0 0.0
    %1038 = vmatpush.msra.mxu0 0.0
    %1039 = vmatpush.msra.mxu0 0.0
    %1040 = vmatpush.msra.mxu0 0.0
    %1041 = vmatpush.msra.mxu0 0.0
    %1042 = vmatpush.msra.mxu0 %v1022
    %1043 = vmatmul.f32.gmra.mxu0 %v1025
    %v1044 = vpop.f32.mrf.mxu0
    %v1045 = vadd.f32 0.0, %v1044
    %1046 = vdwg.mxu0
    %v1048 = vsel %vm245, %v1045, 0
    %1050 = vmatpush.msra.mxu0 0.0
    %1051 = vmatpush.msra.mxu0 0.0
    %1052 = vmatpush.msra.mxu0 0.0
    %1053 = vmatpush.msra.mxu0 0.0
    %1054 = vmatpush.msra.mxu0 0.0
    %1055 = vmatpush.msra.mxu0 0.0
    %1056 = vmatpush.msra.mxu0 0.0
    %1057 = vmatpush.msra.mxu0 0.0
    %1058 = vmatpush.msra.mxu0 0.0
    %1059 = vmatpush.msra.mxu0 0.0
    %1060 = vmatpush.msra.mxu0 0.0
    %1061 = vmatpush.msra.mxu0 0.0
    %1062 = vmatpush.msra.mxu0 0.0
    %1063 = vmatpush.msra.mxu0 0.0
    %1064 = vmatpush.msra.mxu0 0.0
    %1065 = vmatpush.msra.mxu0 %v45
    %1066 = vmatmul.f32.gmra.mxu0 %v1048
    %v1067 = vpop.f32.mrf.mxu0
    %v1068 = vadd.f32 0.0, %v1067
    %1069 = vdwg.mxu0
    %v1070 = vadd.f32 %v966, %v1068
    %v1071 = vadd.f32 %v40, %v1070
    %v1072 = vadd.f32 %v1071, %v656
    %v1073 = vsel %vm46, %v657, 0.0
    %1074 = vadd.xlane.f32.xlu0 %v1073
    %v1075 = vpop.xlane.xlu0 %1074
    %v1076 = vsel %vm46, %v1072, 0.0
    %1077 = vadd.xlane.f32.xlu0 %v1076
    %v1078 = vpop.xlane.xlu0 %1077
    %v1079 = vmul.f32 %v1075, %v59
    %v1080 = vmul.f32 %v1078, %v59
    %v1081 = vsub.f32 %v657, %v1079
    %v1082 = vsub.f32 %v1072, %v1080
    %v1083 = vmul.f32 %v1081, %v1081
    %v1084 = vmul.f32 %v1082, %v1082
    %v1085 = vsel %vm46, %v1083, 0.0
    %1086 = vadd.xlane.f32.xlu0 %v1085
    %v1087 = vpop.xlane.xlu0 %1086
    %v1088 = vsel %vm46, %v1084, 0.0
    %1089 = vadd.xlane.f32.xlu0 %v1088
    %v1090 = vpop.xlane.xlu0 %1089
    %v1091 = vmul.f32 %v1087, %v59
    %v1092 = vmul.f32 %v1090, %v59
    %v1093 = vadd.f32 %v1091, 1e-06
    %v1094 = vadd.f32 %v1092, 1e-06
    %v1095 = vrsqrt.pop %v1093
    %v1096 = vmul.f32 %v1095, %v1093
    %v1097 = vmul.f32 %v1096, %v1095
    %v1098 = vmul.f32 0.5, %v1097
    %v1099 = vsub.f32 1.5, %v1098
    %v1100 = vmul.f32 %v1095, %v1099
    %vm1101 = vweird.f32 %v1093
    %vm1102 = vweird.f32 %v1095
    %vm1103 = vmor %vm1101, %vm1102
    %v1104 = vsel %vm1103, %v1095, %v1100
    %v1105 = vrsqrt.pop %v1094
    %v1106 = vmul.f32 %v1105, %v1094
    %v1107 = vmul.f32 %v1106, %v1105
    %v1108 = vmul.f32 0.5, %v1107
    %v1109 = vsub.f32 1.5, %v1108
    %v1110 = vmul.f32 %v1105, %v1109
    %vm1111 = vweird.f32 %v1094
    %vm1112 = vweird.f32 %v1105
    %vm1113 = vmor %vm1111, %vm1112
    %v1114 = vsel %vm1113, %v1105, %v1110
    %v1115 = vmul.f32 %v1081, %v1104
    %v1116 = vmul.f32 %v1082, %v1114
    %v1117 = vperm.slane %v41, 2
    %v1118 = vmul.f32 %v1115, %v1117
    %v1119 = vmul.f32 %v1116, %v1117
    %v1120 = vperm.slane %v41, 3
    %v1121 = vadd.f32 %v1118, %v1120
    %v1122 = vadd.f32 %v1119, %v1120
    %v1123 = vld [vmem:[%s4] sm:$0xff]
    %v1124 = vld [vmem:[%s4 + $0x8] sm:$0xff]
    %v1125 = vld [vmem:[%s4 + $0x10] sm:$0xff]
    %v1126 = vld [vmem:[%s4 + $0x18] sm:$0xff]
    %v1127 = vld [vmem:[%s5] sm:$0x1]
    %v1129 = vperm.slane %v1127, 0
    %v1132 = vsel %vm46, %v1121, 0
    %v1135 = vsel %vm46, %v1122, 0
    %1137 = vmatpush.msra.mxu0 0.0
    %1138 = vmatpush.msra.mxu0 0.0
    %1139 = vmatpush.msra.mxu0 0.0
    %1140 = vmatpush.msra.mxu0 0.0
    %1141 = vmatpush.msra.mxu0 0.0
    %1142 = vmatpush.msra.mxu0 0.0
    %1143 = vmatpush.msra.mxu0 0.0
    %1144 = vmatpush.msra.mxu0 0.0
    %1145 = vmatpush.msra.mxu0 0.0
    %1146 = vmatpush.msra.mxu0 0.0
    %1147 = vmatpush.msra.mxu0 0.0
    %1148 = vmatpush.msra.mxu0 0.0
    %1149 = vmatpush.msra.mxu0 %v1126
    %1150 = vmatpush.msra.mxu0 %v1125
    %1151 = vmatpush.msra.mxu0 %v1124
    %1152 = vmatpush.msra.mxu0 %v1123
    %1153 = vmatmul.f32.gmra.mxu0 %v1132
    %v1154 = vpop.f32.mrf.mxu0
    %v1155 = vadd.f32 %v1129, %v1154
    %1156 = vmatmul.f32.gmra.mxu0 %v1135
    %v1157 = vpop.f32.mrf.mxu0
    %v1158 = vadd.f32 %v1129, %v1157
    %1159 = vdwg.mxu0
    %v1160 = vmul.f32 %v1155, 0.5
    %v1161 = vmul.f32 %v1158, 0.5
    %v1162 = vmul.f32 %v1155, %v1155
    %v1163 = vmul.f32 %v1158, %v1158
    %v1164 = vmul.f32 %v1162, %v1155
    %v1165 = vmul.f32 %v1163, %v1158
    %v1166 = vmul.f32 %v1164, 0.044715
    %v1167 = vmul.f32 %v1165, 0.044715
    %v1168 = vadd.f32 %v1155, %v1166
    %v1169 = vadd.f32 %v1158, %v1167
    %v1170 = vmul.f32 %v1168, 0.7978846
    %v1171 = vmul.f32 %v1169, 0.7978846
    %v1172 = vtanh.pop %v1170
    %v1173 = vtanh.pop %v1171
    %v1174 = vadd.f32 %v1172, 1.0
    %v1175 = vadd.f32 %v1173, 1.0
    %v1176 = vmul.f32 %v1160, %v1174
    %v1177 = vmul.f32 %v1161, %v1175
    %v1178 = vld [vmem:[%s6] sm:$0xff]
    %v1179 = vld [vmem:[%s6 + $0x8] sm:$0xff]
    %v1180 = vld [vmem:[%s6 + $0x10] sm:$0xff]
    %v1181 = vld [vmem:[%s6 + $0x18] sm:$0xff]
    %v1182 = vld [vmem:[%s6 + $0x20] sm:$0xff]
    %v1183 = vld [vmem:[%s6 + $0x28] sm:$0xff]
    %v1184 = vld [vmem:[%s6 + $0x30] sm:$0xff]
    %v1185 = vld [vmem:[%s6 + $0x38] sm:$0xff]
    %v1187 = vsel %vm149, %v1176, 0
    %v1190 = vsel %vm149, %v1177, 0
    %1192 = vmatpush.msra.mxu0 0.0
    %1193 = vmatpush.msra.mxu0 0.0
    %1194 = vmatpush.msra.mxu0 0.0
    %1195 = vmatpush.msra.mxu0 0.0
    %1196 = vmatpush.msra.mxu0 0.0
    %1197 = vmatpush.msra.mxu0 0.0
    %1198 = vmatpush.msra.mxu0 0.0
    %1199 = vmatpush.msra.mxu0 0.0
    %1200 = vmatpush.msra.mxu0 %v1185
    %1201 = vmatpush.msra.mxu0 %v1184
    %1202 = vmatpush.msra.mxu0 %v1183
    %1203 = vmatpush.msra.mxu0 %v1182
    %1204 = vmatpush.msra.mxu0 %v1181
    %1205 = vmatpush.msra.mxu0 %v1180
    %1206 = vmatpush.msra.mxu0 %v1179
    %1207 = vmatpush.msra.mxu0 %v1178
    %1208 = vmatmul.f32.gmra.mxu0 %v1187
    %v1209 = vpop.f32.mrf.mxu0
    %v1210 = vadd.f32 0.0, %v1209
    %1211 = vmatmul.f32.gmra.mxu0 %v1190
    %v1212 = vpop.f32.mrf.mxu0
    %v1213 = vadd.f32 0.0, %v1212
    %1214 = vdwg.mxu0
    %v1215 = vadd.f32 %v657, %v1210
    %v1216 = vadd.f32 %v1072, %v1213
    %v1217 = vperm.slane %v41, 5
    %v1218 = vadd.f32 %v1215, %v1217
    %v1219 = vadd.f32 %v1216, %v1217
    %1220 = vst.msk [vmem:[#allocation2] sm:$0xff] %vm46, %v1218
    %1221 = vst.msk [vmem:[#allocation2 + $0x8] sm:$0xff] %vm46, %v1219
    // Predicated region
    $region42: #{block_forward.1} parent=1 // pred_check
      _
    $region43: #{block_forward.1} parent=1 // pred_check_branch
      %1223 = sbr.rel (0) target = $region45
    $region44: #{block_forward.1} parent=1 // pred_region
      %1225 = vsyncadd [#allocation3], 0
      %s1226 = sshll.u32 [#allocation2], 4
      %s1227 = int_to_ptr.vmem [resolvable:$true] %s1226
      %s1228 = sshll.u32 %s10, 4
      %s1229 = int_to_ptr.hbm [resolvable:$true] %s1228
      %1234 = dma.vmem_to_hbm [thread:$0]  %s1227, 256, %s1229, [#allocation3], 128, 128, 8
    $region45: #{block_forward.1} parent=1 // pred_fallthru
      _
    // Predicated region
    $region46: #{block_forward.1} parent=1 // pred_check
      _
    $region47: #{block_forward.1} parent=1 // pred_check_branch
      %1236 = sbr.rel (0) target = $region49
    $region48: #{block_forward.1} parent=1 // pred_region
      %1238 = vsyncadd [#allocation5], 0
      %s1239 = sshll.u32 [#allocation4], 4
      %s1240 = int_to_ptr.vmem [resolvable:$true] %s1239
      %s1241 = sshll.u32 %s11, 4
      %s1242 = int_to_ptr.hbm [resolvable:$true] %s1241
      %1247 = dma.vmem_to_hbm [thread:$0]  %s1240, 1024, %s1242, [#allocation5], 128, 128, 8
    $region49: #{block_forward.1} parent=1 // pred_fallthru
      _
    // Predicated region
    $region50: #{block_forward.1} parent=1 // pred_check
      _
    $region51: #{block_forward.1} parent=1 // pred_check_branch
      %1249 = sbr.rel (0) target = $region53
    $region52: #{block_forward.1} parent=1 // pred_region
      %1251 = dma.done [#allocation3], 256
    $region53: #{block_forward.1} parent=1 // pred_fallthru
      _
    // Predicated region
    $region54: #{block_forward.1} parent=1 // pred_check
      _
    $region55: #{block_forward.1} parent=1 // pred_check_branch
      %1253 = sbr.rel (0) target = $region57
    $region56: #{block_forward.1} parent=1 // pred_region
      %1255 = dma.done [#allocation5], 1024
    $region57: #{block_forward.1} parent=1 // pred_fallthru
      _
    %1256 = vsyncpa [#allocation3], 1
    %1257 = vsyncpa [#allocation5], 1

</llo_original>
